<compile_context>
chip_gen: v7x
topology: tpu7x:2x2x1
jax: 0.10.0
libtpu: 0.0.40
codegen_flags: <defaults>
</compile_context>

<pallas_src>
import functools

import jax
import jax.numpy as jnp
from jax import lax
from jax.experimental import pallas as pl
from jax.experimental.pallas import tpu as pltpu


def lstm_filter_kernel(x_ref,                      # (T*B, I)  time-major, pre-flattened
                       wih1_ref, whh1_ref, b1_ref,  # (I,4H), (H,4H), (1,4H)
                       wih2_ref, whh2_ref, b2_ref,  # (H,4H), (H,4H), (1,4H)
                       wfc1_ref, bfc1_ref,          # (H,O), (1,O)
                       wfc2_ref, bfc2_ref,          # (O,O), (1,O)
                       out_ref,                     # (B, O)
                       state_ref,                   # (B, 4H): [h1 | h2 | c1 | c2]
                       *, T, B):
    H = whh1_ref.shape[0]
    G = 4 * H

    # ---------------- one-time work, hoisted off the recurrence ----------------
    # Loop-resident weights in bf16 (MXU operands); accumulation stays f32.
    whh1_bf = whh1_ref[...].astype(jnp.bfloat16)
    wih2_bf = wih2_ref[...].astype(jnp.bfloat16)
    whh2_bf = whh2_ref[...].astype(jnp.bfloat16)
    b2_b = jnp.broadcast_to(b2_ref[...], (B, G))          # bias broadcast hoisted

    # Layer-1 input projection for every timestep in ONE f32 matmul (kept as a
    # value; no scratch round-trip needed at small T*B).
    pre = jnp.dot(x_ref[...], wih1_ref[...],
                  preferred_element_type=jnp.float32) + b1_ref[...]   # (T*B, 4H)

    # Lane-constant vectors implementing sigmoid via a single tanh pass:
    #   sigmoid(x) = 0.5*tanh(0.5*x) + 0.5   on the i/f/o lanes
    #   tanh(x)    = 1.0*tanh(1.0*x) + 0.0   on the g lanes (PyTorch order i,f,g,o)
    lane = lax.broadcasted_iota(jnp.int32, (B, G), 1)
    is_g = (lane >= 2 * H) & (lane < 3 * H)
    pre_scale = jnp.where(is_g, 1.0, 0.5).astype(jnp.float32)
    post_scale = pre_scale
    post_offset = jnp.where(is_g, 0.0, 0.5).astype(jnp.float32)

    def cell_act(gates, c):
        # ONE EUP pass over all 4H lanes (tanh), VPU-only scale/offset filler.
        act = post_scale * jnp.tanh(pre_scale * gates) + post_offset
        i = act[:, 0 * H:1 * H]
        f = act[:, 1 * H:2 * H]
        g = act[:, 2 * H:3 * H]
        o = act[:, 3 * H:4 * H]
        c_new = f * c + i * g
        h_new = o * jnp.tanh(c_new)
        return h_new, c_new

    zeros = jnp.zeros((B, H), jnp.float32)
    h1, c1, h2, c2 = zeros, zeros, zeros, zeros

    # T is static and tiny -> full static unroll with STATIC slices into `pre`
    # (t is a Python int, so no dynamic-slice / scratch load on the serial path).
    # TODO(synk): for large T, switch to a T-chunked pipeline (pl.ANY x +
    # pltpu.emit_pipeline / make_async_copy double-buffering) so VMEM stays
    # bounded on v7x (64 MiB) / v5e (16 MiB default scoped limit).
    for t in range(T):
        # Layer 1: only the recurrent bf16 matmul remains on the serial path.
        gates1 = pre[t * B:(t + 1) * B, :] + jnp.dot(
            h1.astype(jnp.bfloat16), whh1_bf, preferred_element_type=jnp.float32)
        h1, c1 = cell_act(gates1, c1)

        # Layer 2: two MXU pushes (co-issue in the 2 vector-extended slots),
        # no per-step lane concat.
        gates2 = (jnp.dot(h1.astype(jnp.bfloat16), wih2_bf,
                          preferred_element_type=jnp.float32)
                  + jnp.dot(h2.astype(jnp.bfloat16), whh2_bf,
                            preferred_element_type=jnp.float32)
                  + b2_b)
        h2, c2 = cell_act(gates2, c2)

    # FC head on the last-timestep layer-2 output (== lstm_out[:, -1, :]); f32.
    y = jnp.maximum(
        jnp.dot(h2, wfc1_ref[...], preferred_element_type=jnp.float32) + bfc1_ref[...],
        0.0)
    y = jax.nn.sigmoid(
        jnp.dot(y, wfc2_ref[...], preferred_element_type=jnp.float32) + bfc2_ref[...])

    out_ref[...] = y
    # One lane-dense (B, 4H) store instead of four masked (B, H) partial stores.
    state_ref[...] = jnp.concatenate([h1, h2, c1, c2], axis=1)


def lstm_filter_forward(x, params):
    """x: (B, T, I) float32.  Returns (sigmoid_out, (h_n, c_n)) like the PyTorch module."""
    B, T, I = x.shape
    H = params["w_hh_l0"].shape[1]
    O = params["w_fc2"].shape[0]

    # Layout plumbing done in the wrapper (free XLA work): time-major + flattened.
    x_flat = jnp.transpose(x, (1, 0, 2)).reshape(T * B, I)

    args = (
        x_flat,
        params["w_ih_l0"].T,                                          # (I, 4H)
        params["w_hh_l0"].T,                                          # (H, 4H)
        (params["b_ih_l0"] + params["b_hh_l0"]).reshape(1, -1),        # (1, 4H)
        params["w_ih_l1"].T,                                          # (H, 4H)
        params["w_hh_l1"].T,                                          # (H, 4H)
        (params["b_ih_l1"] + params["b_hh_l1"]).reshape(1, -1),        # (1, 4H)
        params["w_fc1"].T, params["b_fc1"].reshape(1, -1),
        params["w_fc2"].T, params["b_fc2"].reshape(1, -1),
    )

    vmem = pl.BlockSpec(memory_space=pltpu.MemorySpace.VMEM)
    # TODO(synk): at large batch, add a batch grid with
    # dimension_semantics=("parallel",) so v7x's 2 TensorCores each run half the
    # batch; at B=2 the MXU rows are mostly idle regardless (caller should batch
    # >=8, ideally 128-256, sequences per call for throughput).
    out, state = pl.pallas_call(
        functools.partial(lstm_filter_kernel, T=T, B=B),
        out_shape=(
            jax.ShapeDtypeStruct((B, O), jnp.float32),
            jax.ShapeDtypeStruct((B, 4 * H), jnp.float32),
        ),
        in_specs=[vmem] * len(args),
        out_specs=(vmem, vmem),
    )(*args)

    h_n = jnp.stack([state[:, 0 * H:1 * H], state[:, 1 * H:2 * H]], axis=0)
    c_n = jnp.stack([state[:, 2 * H:3 * H], state[:, 3 * H:4 * H]], axis=0)
    return out, (h_n, c_n)


def init_params(key, input_size, hidden_size, output_size):
    """Deterministic synthetic params with PyTorch-default-style uniform init."""
    ks = jax.random.split(key, 14)
    k_lstm = 1.0 / jnp.sqrt(hidden_size)
    k_fc1 = 1.0 / jnp.sqrt(hidden_size)
    k_fc2 = 1.0 / jnp.sqrt(output_size)

    def u(k, shape, bound):
        return jax.random.uniform(k, shape, jnp.float32, -bound, bound)

    return {
        # LSTM layer 0
        "w_ih_l0": u(ks[0], (4 * hidden_size, input_size), k_lstm),
        "w_hh_l0": u(ks[1], (4 * hidden_size, hidden_size), k_lstm),
        "b_ih_l0": u(ks[2], (4 * hidden_size,), k_lstm),
        "b_hh_l0": u(ks[3], (4 * hidden_size,), k_lstm),
        # LSTM layer 1
        "w_ih_l1": u(ks[4], (4 * hidden_size, hidden_size), k_lstm),
        "w_hh_l1": u(ks[5], (4 * hidden_size, hidden_size), k_lstm),
        "b_ih_l1": u(ks[6], (4 * hidden_size,), k_lstm),
        "b_hh_l1": u(ks[7], (4 * hidden_size,), k_lstm),
        # FC head
        "w_fc1": u(ks[8], (output_size, hidden_size), k_fc1),
        "b_fc1": u(ks[9], (output_size,), k_fc1),
        "w_fc2": u(ks[10], (output_size, output_size), k_fc2),
        "b_fc2": u(ks[11], (output_size,), k_fc2),
    }


def reference_forward(x, params):
    """Pure-JAX f32 reference mirroring torch.nn.LSTM / Linear semantics."""
    B, T, _ = x.shape
    H = params["w_hh_l0"].shape[1]

    def cell(x_t, h, c, wih, whh, bih, bhh):
        g = x_t @ wih.T + bih + h @ whh.T + bhh
        i, f, gg, o = jnp.split(g, 4, axis=1)
        i, f, o = jax.nn.sigmoid(i), jax.nn.sigmoid(f), jax.nn.sigmoid(o)
        gg = jnp.tanh(gg)
        c = f * c + i * gg
        h = o * jnp.tanh(c)
        return h, c

    h1 = c1 = h2 = c2 = jnp.zeros((B, H), jnp.float32)
    for t in range(T):
        h1, c1 = cell(x[:, t, :], h1, c1,
                      params["w_ih_l0"], params["w_hh_l0"],
                      params["b_ih_l0"], params["b_hh_l0"])
        h2, c2 = cell(h1, h2, c2,
                      params["w_ih_l1"], params["w_hh_l1"],
                      params["b_ih_l1"], params["b_hh_l1"])
    y = jnp.maximum(h2 @ params["w_fc1"].T + params["b_fc1"], 0.0)
    y = jax.nn.sigmoid(y @ params["w_fc2"].T + params["b_fc2"])
    return y, (jnp.stack([h1, h2], 0), jnp.stack([c1, c2], 0))


if __name__ == "__main__":
    # Small shapes consistent with the module's forward: x is (batch, seq, input_size).
    B, T, I, H, O = 2, 8, 16, 32, 16

    key = jax.random.PRNGKey(0)
    k_x, k_p = jax.random.split(key)
    x = jax.random.normal(k_x, (B, T, I), jnp.float32)
    params = init_params(k_p, I, H, O)

    out, (h_n, c_n) = lstm_filter_forward(x, params)
    jax.block_until_ready((out, h_n, c_n))

    # Sanity check against a pure-JAX f32 reference of the PyTorch forward.
    # The recurrent MXU operands are bf16 (perf-review item), so expect ~1e-3
    # agreement; 2e-2 gives comfortable margin over 2*T accumulating cell steps.
    ref_out, (ref_h, ref_c) = reference_forward(x, params)
    tol = 2e-2
    assert jnp.allclose(out, ref_out, atol=tol), "output mismatch"
    assert jnp.allclose(h_n, ref_h, atol=tol), "h_n mismatch"
    assert jnp.allclose(c_n, ref_c, atol=tol), "c_n mismatch"

    print("KERNEL_OK")
</pallas_src>

<mosaic_0001>
module attributes {stable_mosaic.version = 11 : i64} {
  func.func @lstm_filter_kernel(%arg0: memref<16x16xf32, #tpu.memory_space<vmem>>, %arg1: memref<16x128xf32, #tpu.memory_space<vmem>>, %arg2: memref<32x128xf32, #tpu.memory_space<vmem>>, %arg3: memref<1x128xf32, #tpu.memory_space<vmem>>, %arg4: memref<32x128xf32, #tpu.memory_space<vmem>>, %arg5: memref<32x128xf32, #tpu.memory_space<vmem>>, %arg6: memref<1x128xf32, #tpu.memory_space<vmem>>, %arg7: memref<32x16xf32, #tpu.memory_space<vmem>>, %arg8: memref<1x16xf32, #tpu.memory_space<vmem>>, %arg9: memref<16x16xf32, #tpu.memory_space<vmem>>, %arg10: memref<1x16xf32, #tpu.memory_space<vmem>>, %arg11: memref<2x16xf32, #tpu.memory_space<vmem>>, %arg12: memref<2x128xf32, #tpu.memory_space<vmem>>) attributes {dimension_semantics = [], scalar_prefetch = 0 : i64, scratch_operands = 0 : i64, tpu.core_type = #tpu.core_type<tc>} {
    %c0 = arith.constant 0 : index
    %c0_0 = arith.constant 0 : index
    %0 = vector.load %arg2[%c0, %c0_0] : memref<32x128xf32, #tpu.memory_space<vmem>>, vector<32x128xf32>
    %1 = arith.truncf %0 : vector<32x128xf32> to vector<32x128xbf16>
    %c0_1 = arith.constant 0 : index
    %c0_2 = arith.constant 0 : index
    %2 = vector.load %arg4[%c0_1, %c0_2] : memref<32x128xf32, #tpu.memory_space<vmem>>, vector<32x128xf32>
    %3 = arith.truncf %2 : vector<32x128xf32> to vector<32x128xbf16>
    %c0_3 = arith.constant 0 : index
    %c0_4 = arith.constant 0 : index
    %4 = vector.load %arg5[%c0_3, %c0_4] : memref<32x128xf32, #tpu.memory_space<vmem>>, vector<32x128xf32>
    %5 = arith.truncf %4 : vector<32x128xf32> to vector<32x128xbf16>
    %c0_5 = arith.constant 0 : index
    %c0_6 = arith.constant 0 : index
    %6 = vector.load %arg6[%c0_5, %c0_6] : memref<1x128xf32, #tpu.memory_space<vmem>>, vector<1x128xf32>
    %7 = vector.shape_cast %6 : vector<1x128xf32> to vector<1x128xf32>
    %8 = vector.broadcast %7 : vector<1x128xf32> to vector<2x128xf32>
    %c0_7 = arith.constant 0 : index
    %c0_8 = arith.constant 0 : index
    %9 = vector.load %arg0[%c0_7, %c0_8] : memref<16x16xf32, #tpu.memory_space<vmem>>, vector<16x16xf32>
    %c0_9 = arith.constant 0 : index
    %c0_10 = arith.constant 0 : index
    %10 = vector.load %arg1[%c0_9, %c0_10] : memref<16x128xf32, #tpu.memory_space<vmem>>, vector<16x128xf32>
    %cst = arith.constant dense<0.000000e+00> : vector<16x128xf32>
    %11 = tpu.matmul %9, %10, %cst {dimension_numbers = #tpu.dot_dimension_numbers<[1], [0], [0], [1], [0, 0, 1, 1], [], []>} : vector<16x16xf32>, vector<16x128xf32>, vector<16x128xf32> -> vector<16x128xf32>
    %c0_11 = arith.constant 0 : index
    %c0_12 = arith.constant 0 : index
    %12 = vector.load %arg3[%c0_11, %c0_12] : memref<1x128xf32, #tpu.memory_space<vmem>>, vector<1x128xf32>
    %13 = vector.broadcast %12 : vector<1x128xf32> to vector<16x128xf32>
    %14 = arith.addf %11, %13 : vector<16x128xf32>
    %15 = tpu.iota {dimensions = array<i32: 1>} : vector<2x128xi32>
    %c64_i32 = arith.constant 64 : i32
    %16 = vector.broadcast %c64_i32 : i32 to vector<2x128xi32>
    %17 = arith.cmpi sge, %15, %16 : vector<2x128xi32>
    %c96_i32 = arith.constant 96 : i32
    %18 = vector.broadcast %c96_i32 : i32 to vector<2x128xi32>
    %19 = arith.cmpi slt, %15, %18 : vector<2x128xi32>
    %20 = arith.andi %17, %19 : vector<2x128xi1>
    %cst_13 = arith.constant 1.000000e+00 : f32
    %cst_14 = arith.constant 5.000000e-01 : f32
    %21 = vector.broadcast %cst_13 : f32 to vector<2x128xf32>
    %22 = vector.broadcast %cst_14 : f32 to vector<2x128xf32>
    %23 = arith.select %20, %21, %22 : vector<2x128xi1>, vector<2x128xf32>
    %cst_15 = arith.constant 0.000000e+00 : f32
    %cst_16 = arith.constant 5.000000e-01 : f32
    %24 = vector.broadcast %cst_15 : f32 to vector<2x128xf32>
    %25 = vector.broadcast %cst_16 : f32 to vector<2x128xf32>
    %26 = arith.select %20, %24, %25 : vector<2x128xi1>, vector<2x128xf32>
    %cst_17 = arith.constant 0.000000e+00 : f32
    %27 = vector.broadcast %cst_17 : f32 to vector<2x32xf32>
    %28 = vector.extract_strided_slice %14 {offsets = [0, 0], sizes = [2, 128], strides = [1, 1]} : vector<16x128xf32> to vector<2x128xf32>
    %29 = arith.truncf %27 : vector<2x32xf32> to vector<2x32xbf16>
    %cst_18 = arith.constant dense<0.000000e+00> : vector<2x128xf32>
    %30 = tpu.matmul %29, %1, %cst_18 {dimension_numbers = #tpu.dot_dimension_numbers<[1], [0], [0], [1], [0, 0, 1, 1], [], []>} : vector<2x32xbf16>, vector<32x128xbf16>, vector<2x128xf32> -> vector<2x128xf32>
    %31 = arith.addf %28, %30 : vector<2x128xf32>
    %32 = arith.mulf %23, %31 : vector<2x128xf32>
    %33 = math.tanh %32 : vector<2x128xf32>
    %34 = arith.mulf %23, %33 : vector<2x128xf32>
    %35 = arith.addf %34, %26 : vector<2x128xf32>
    %36 = vector.extract_strided_slice %35 {offsets = [0, 0], sizes = [2, 32], strides = [1, 1]} : vector<2x128xf32> to vector<2x32xf32>
    %37 = vector.extract_strided_slice %35 {offsets = [0, 32], sizes = [2, 32], strides = [1, 1]} : vector<2x128xf32> to vector<2x32xf32>
    %38 = vector.extract_strided_slice %35 {offsets = [0, 64], sizes = [2, 32], strides = [1, 1]} : vector<2x128xf32> to vector<2x32xf32>
    %39 = vector.extract_strided_slice %35 {offsets = [0, 96], sizes = [2, 32], strides = [1, 1]} : vector<2x128xf32> to vector<2x32xf32>
    %40 = arith.mulf %37, %27 : vector<2x32xf32>
    %41 = arith.mulf %36, %38 : vector<2x32xf32>
    %42 = arith.addf %40, %41 : vector<2x32xf32>
    %43 = math.tanh %42 : vector<2x32xf32>
    %44 = arith.mulf %39, %43 : vector<2x32xf32>
    %45 = arith.truncf %44 : vector<2x32xf32> to vector<2x32xbf16>
    %cst_19 = arith.constant dense<0.000000e+00> : vector<2x128xf32>
    %46 = tpu.matmul %45, %3, %cst_19 {dimension_numbers = #tpu.dot_dimension_numbers<[1], [0], [0], [1], [0, 0, 1, 1], [], []>} : vector<2x32xbf16>, vector<32x128xbf16>, vector<2x128xf32> -> vector<2x128xf32>
    %47 = arith.truncf %27 : vector<2x32xf32> to vector<2x32xbf16>
    %cst_20 = arith.constant dense<0.000000e+00> : vector<2x128xf32>
    %48 = tpu.matmul %47, %5, %cst_20 {dimension_numbers = #tpu.dot_dimension_numbers<[1], [0], [0], [1], [0, 0, 1, 1], [], []>} : vector<2x32xbf16>, vector<32x128xbf16>, vector<2x128xf32> -> vector<2x128xf32>
    %49 = arith.addf %46, %48 : vector<2x128xf32>
    %50 = arith.addf %49, %8 : vector<2x128xf32>
    %51 = arith.mulf %23, %50 : vector<2x128xf32>
    %52 = math.tanh %51 : vector<2x128xf32>
    %53 = arith.mulf %23, %52 : vector<2x128xf32>
    %54 = arith.addf %53, %26 : vector<2x128xf32>
    %55 = vector.extract_strided_slice %54 {offsets = [0, 0], sizes = [2, 32], strides = [1, 1]} : vector<2x128xf32> to vector<2x32xf32>
    %56 = vector.extract_strided_slice %54 {offsets = [0, 32], sizes = [2, 32], strides = [1, 1]} : vector<2x128xf32> to vector<2x32xf32>
    %57 = vector.extract_strided_slice %54 {offsets = [0, 64], sizes = [2, 32], strides = [1, 1]} : vector<2x128xf32> to vector<2x32xf32>
    %58 = vector.extract_strided_slice %54 {offsets = [0, 96], sizes = [2, 32], strides = [1, 1]} : vector<2x128xf32> to vector<2x32xf32>
    %59 = arith.mulf %56, %27 : vector<2x32xf32>
    %60 = arith.mulf %55, %57 : vector<2x32xf32>
    %61 = arith.addf %59, %60 : vector<2x32xf32>
    %62 = math.tanh %61 : vector<2x32xf32>
    %63 = arith.mulf %58, %62 : vector<2x32xf32>
    %64 = vector.extract_strided_slice %14 {offsets = [2, 0], sizes = [2, 128], strides = [1, 1]} : vector<16x128xf32> to vector<2x128xf32>
    %65 = arith.truncf %44 : vector<2x32xf32> to vector<2x32xbf16>
    %cst_21 = arith.constant dense<0.000000e+00> : vector<2x128xf32>
    %66 = tpu.matmul %65, %1, %cst_21 {dimension_numbers = #tpu.dot_dimension_numbers<[1], [0], [0], [1], [0, 0, 1, 1], [], []>} : vector<2x32xbf16>, vector<32x128xbf16>, vector<2x128xf32> -> vector<2x128xf32>
    %67 = arith.addf %64, %66 : vector<2x128xf32>
    %68 = arith.mulf %23, %67 : vector<2x128xf32>
    %69 = math.tanh %68 : vector<2x128xf32>
    %70 = arith.mulf %23, %69 : vector<2x128xf32>
    %71 = arith.addf %70, %26 : vector<2x128xf32>
    %72 = vector.extract_strided_slice %71 {offsets = [0, 0], sizes = [2, 32], strides = [1, 1]} : vector<2x128xf32> to vector<2x32xf32>
    %73 = vector.extract_strided_slice %71 {offsets = [0, 32], sizes = [2, 32], strides = [1, 1]} : vector<2x128xf32> to vector<2x32xf32>
    %74 = vector.extract_strided_slice %71 {offsets = [0, 64], sizes = [2, 32], strides = [1, 1]} : vector<2x128xf32> to vector<2x32xf32>
    %75 = vector.extract_strided_slice %71 {offsets = [0, 96], sizes = [2, 32], strides = [1, 1]} : vector<2x128xf32> to vector<2x32xf32>
    %76 = arith.mulf %73, %42 : vector<2x32xf32>
    %77 = arith.mulf %72, %74 : vector<2x32xf32>
    %78 = arith.addf %76, %77 : vector<2x32xf32>
    %79 = math.tanh %78 : vector<2x32xf32>
    %80 = arith.mulf %75, %79 : vector<2x32xf32>
    %81 = arith.truncf %80 : vector<2x32xf32> to vector<2x32xbf16>
    %cst_22 = arith.constant dense<0.000000e+00> : vector<2x128xf32>
    %82 = tpu.matmul %81, %3, %cst_22 {dimension_numbers = #tpu.dot_dimension_numbers<[1], [0], [0], [1], [0, 0, 1, 1], [], []>} : vector<2x32xbf16>, vector<32x128xbf16>, vector<2x128xf32> -> vector<2x128xf32>
    %83 = arith.truncf %63 : vector<2x32xf32> to vector<2x32xbf16>
    %cst_23 = arith.constant dense<0.000000e+00> : vector<2x128xf32>
    %84 = tpu.matmul %83, %5, %cst_23 {dimension_numbers = #tpu.dot_dimension_numbers<[1], [0], [0], [1], [0, 0, 1, 1], [], []>} : vector<2x32xbf16>, vector<32x128xbf16>, vector<2x128xf32> -> vector<2x128xf32>
    %85 = arith.addf %82, %84 : vector<2x128xf32>
    %86 = arith.addf %85, %8 : vector<2x128xf32>
    %87 = arith.mulf %23, %86 : vector<2x128xf32>
    %88 = math.tanh %87 : vector<2x128xf32>
    %89 = arith.mulf %23, %88 : vector<2x128xf32>
    %90 = arith.addf %89, %26 : vector<2x128xf32>
    %91 = vector.extract_strided_slice %90 {offsets = [0, 0], sizes = [2, 32], strides = [1, 1]} : vector<2x128xf32> to vector<2x32xf32>
    %92 = vector.extract_strided_slice %90 {offsets = [0, 32], sizes = [2, 32], strides = [1, 1]} : vector<2x128xf32> to vector<2x32xf32>
    %93 = vector.extract_strided_slice %90 {offsets = [0, 64], sizes = [2, 32], strides = [1, 1]} : vector<2x128xf32> to vector<2x32xf32>
    %94 = vector.extract_strided_slice %90 {offsets = [0, 96], sizes = [2, 32], strides = [1, 1]} : vector<2x128xf32> to vector<2x32xf32>
    %95 = arith.mulf %92, %61 : vector<2x32xf32>
    %96 = arith.mulf %91, %93 : vector<2x32xf32>
    %97 = arith.addf %95, %96 : vector<2x32xf32>
    %98 = math.tanh %97 : vector<2x32xf32>
    %99 = arith.mulf %94, %98 : vector<2x32xf32>
    %100 = vector.extract_strided_slice %14 {offsets = [4, 0], sizes = [2, 128], strides = [1, 1]} : vector<16x128xf32> to vector<2x128xf32>
    %101 = arith.truncf %80 : vector<2x32xf32> to vector<2x32xbf16>
    %cst_24 = arith.constant dense<0.000000e+00> : vector<2x128xf32>
    %102 = tpu.matmul %101, %1, %cst_24 {dimension_numbers = #tpu.dot_dimension_numbers<[1], [0], [0], [1], [0, 0, 1, 1], [], []>} : vector<2x32xbf16>, vector<32x128xbf16>, vector<2x128xf32> -> vector<2x128xf32>
    %103 = arith.addf %100, %102 : vector<2x128xf32>
    %104 = arith.mulf %23, %103 : vector<2x128xf32>
    %105 = math.tanh %104 : vector<2x128xf32>
    %106 = arith.mulf %23, %105 : vector<2x128xf32>
    %107 = arith.addf %106, %26 : vector<2x128xf32>
    %108 = vector.extract_strided_slice %107 {offsets = [0, 0], sizes = [2, 32], strides = [1, 1]} : vector<2x128xf32> to vector<2x32xf32>
    %109 = vector.extract_strided_slice %107 {offsets = [0, 32], sizes = [2, 32], strides = [1, 1]} : vector<2x128xf32> to vector<2x32xf32>
    %110 = vector.extract_strided_slice %107 {offsets = [0, 64], sizes = [2, 32], strides = [1, 1]} : vector<2x128xf32> to vector<2x32xf32>
    %111 = vector.extract_strided_slice %107 {offsets = [0, 96], sizes = [2, 32], strides = [1, 1]} : vector<2x128xf32> to vector<2x32xf32>
    %112 = arith.mulf %109, %78 : vector<2x32xf32>
    %113 = arith.mulf %108, %110 : vector<2x32xf32>
    %114 = arith.addf %112, %113 : vector<2x32xf32>
    %115 = math.tanh %114 : vector<2x32xf32>
    %116 = arith.mulf %111, %115 : vector<2x32xf32>
    %117 = arith.truncf %116 : vector<2x32xf32> to vector<2x32xbf16>
    %cst_25 = arith.constant dense<0.000000e+00> : vector<2x128xf32>
    %118 = tpu.matmul %117, %3, %cst_25 {dimension_numbers = #tpu.dot_dimension_numbers<[1], [0], [0], [1], [0, 0, 1, 1], [], []>} : vector<2x32xbf16>, vector<32x128xbf16>, vector<2x128xf32> -> vector<2x128xf32>
    %119 = arith.truncf %99 : vector<2x32xf32> to vector<2x32xbf16>
    %cst_26 = arith.constant dense<0.000000e+00> : vector<2x128xf32>
    %120 = tpu.matmul %119, %5, %cst_26 {dimension_numbers = #tpu.dot_dimension_numbers<[1], [0], [0], [1], [0, 0, 1, 1], [], []>} : vector<2x32xbf16>, vector<32x128xbf16>, vector<2x128xf32> -> vector<2x128xf32>
    %121 = arith.addf %118, %120 : vector<2x128xf32>
    %122 = arith.addf %121, %8 : vector<2x128xf32>
    %123 = arith.mulf %23, %122 : vector<2x128xf32>
    %124 = math.tanh %123 : vector<2x128xf32>
    %125 = arith.mulf %23, %124 : vector<2x128xf32>
    %126 = arith.addf %125, %26 : vector<2x128xf32>
    %127 = vector.extract_strided_slice %126 {offsets = [0, 0], sizes = [2, 32], strides = [1, 1]} : vector<2x128xf32> to vector<2x32xf32>
    %128 = vector.extract_strided_slice %126 {offsets = [0, 32], sizes = [2, 32], strides = [1, 1]} : vector<2x128xf32> to vector<2x32xf32>
    %129 = vector.extract_strided_slice %126 {offsets = [0, 64], sizes = [2, 32], strides = [1, 1]} : vector<2x128xf32> to vector<2x32xf32>
    %130 = vector.extract_strided_slice %126 {offsets = [0, 96], sizes = [2, 32], strides = [1, 1]} : vector<2x128xf32> to vector<2x32xf32>
    %131 = arith.mulf %128, %97 : vector<2x32xf32>
    %132 = arith.mulf %127, %129 : vector<2x32xf32>
    %133 = arith.addf %131, %132 : vector<2x32xf32>
    %134 = math.tanh %133 : vector<2x32xf32>
    %135 = arith.mulf %130, %134 : vector<2x32xf32>
    %136 = vector.extract_strided_slice %14 {offsets = [6, 0], sizes = [2, 128], strides = [1, 1]} : vector<16x128xf32> to vector<2x128xf32>
    %137 = arith.truncf %116 : vector<2x32xf32> to vector<2x32xbf16>
    %cst_27 = arith.constant dense<0.000000e+00> : vector<2x128xf32>
    %138 = tpu.matmul %137, %1, %cst_27 {dimension_numbers = #tpu.dot_dimension_numbers<[1], [0], [0], [1], [0, 0, 1, 1], [], []>} : vector<2x32xbf16>, vector<32x128xbf16>, vector<2x128xf32> -> vector<2x128xf32>
    %139 = arith.addf %136, %138 : vector<2x128xf32>
    %140 = arith.mulf %23, %139 : vector<2x128xf32>
    %141 = math.tanh %140 : vector<2x128xf32>
    %142 = arith.mulf %23, %141 : vector<2x128xf32>
    %143 = arith.addf %142, %26 : vector<2x128xf32>
    %144 = vector.extract_strided_slice %143 {offsets = [0, 0], sizes = [2, 32], strides = [1, 1]} : vector<2x128xf32> to vector<2x32xf32>
    %145 = vector.extract_strided_slice %143 {offsets = [0, 32], sizes = [2, 32], strides = [1, 1]} : vector<2x128xf32> to vector<2x32xf32>
    %146 = vector.extract_strided_slice %143 {offsets = [0, 64], sizes = [2, 32], strides = [1, 1]} : vector<2x128xf32> to vector<2x32xf32>
    %147 = vector.extract_strided_slice %143 {offsets = [0, 96], sizes = [2, 32], strides = [1, 1]} : vector<2x128xf32> to vector<2x32xf32>
    %148 = arith.mulf %145, %114 : vector<2x32xf32>
    %149 = arith.mulf %144, %146 : vector<2x32xf32>
    %150 = arith.addf %148, %149 : vector<2x32xf32>
    %151 = math.tanh %150 : vector<2x32xf32>
    %152 = arith.mulf %147, %151 : vector<2x32xf32>
    %153 = arith.truncf %152 : vector<2x32xf32> to vector<2x32xbf16>
    %cst_28 = arith.constant dense<0.000000e+00> : vector<2x128xf32>
    %154 = tpu.matmul %153, %3, %cst_28 {dimension_numbers = #tpu.dot_dimension_numbers<[1], [0], [0], [1], [0, 0, 1, 1], [], []>} : vector<2x32xbf16>, vector<32x128xbf16>, vector<2x128xf32> -> vector<2x128xf32>
    %155 = arith.truncf %135 : vector<2x32xf32> to vector<2x32xbf16>
    %cst_29 = arith.constant dense<0.000000e+00> : vector<2x128xf32>
    %156 = tpu.matmul %155, %5, %cst_29 {dimension_numbers = #tpu.dot_dimension_numbers<[1], [0], [0], [1], [0, 0, 1, 1], [], []>} : vector<2x32xbf16>, vector<32x128xbf16>, vector<2x128xf32> -> vector<2x128xf32>
    %157 = arith.addf %154, %156 : vector<2x128xf32>
    %158 = arith.addf %157, %8 : vector<2x128xf32>
    %159 = arith.mulf %23, %158 : vector<2x128xf32>
    %160 = math.tanh %159 : vector<2x128xf32>
    %161 = arith.mulf %23, %160 : vector<2x128xf32>
    %162 = arith.addf %161, %26 : vector<2x128xf32>
    %163 = vector.extract_strided_slice %162 {offsets = [0, 0], sizes = [2, 32], strides = [1, 1]} : vector<2x128xf32> to vector<2x32xf32>
    %164 = vector.extract_strided_slice %162 {offsets = [0, 32], sizes = [2, 32], strides = [1, 1]} : vector<2x128xf32> to vector<2x32xf32>
    %165 = vector.extract_strided_slice %162 {offsets = [0, 64], sizes = [2, 32], strides = [1, 1]} : vector<2x128xf32> to vector<2x32xf32>
    %166 = vector.extract_strided_slice %162 {offsets = [0, 96], sizes = [2, 32], strides = [1, 1]} : vector<2x128xf32> to vector<2x32xf32>
    %167 = arith.mulf %164, %133 : vector<2x32xf32>
    %168 = arith.mulf %163, %165 : vector<2x32xf32>
    %169 = arith.addf %167, %168 : vector<2x32xf32>
    %170 = math.tanh %169 : vector<2x32xf32>
    %171 = arith.mulf %166, %170 : vector<2x32xf32>
    %172 = vector.extract_strided_slice %14 {offsets = [8, 0], sizes = [2, 128], strides = [1, 1]} : vector<16x128xf32> to vector<2x128xf32>
    %173 = arith.truncf %152 : vector<2x32xf32> to vector<2x32xbf16>
    %cst_30 = arith.constant dense<0.000000e+00> : vector<2x128xf32>
    %174 = tpu.matmul %173, %1, %cst_30 {dimension_numbers = #tpu.dot_dimension_numbers<[1], [0], [0], [1], [0, 0, 1, 1], [], []>} : vector<2x32xbf16>, vector<32x128xbf16>, vector<2x128xf32> -> vector<2x128xf32>
    %175 = arith.addf %172, %174 : vector<2x128xf32>
    %176 = arith.mulf %23, %175 : vector<2x128xf32>
    %177 = math.tanh %176 : vector<2x128xf32>
    %178 = arith.mulf %23, %177 : vector<2x128xf32>
    %179 = arith.addf %178, %26 : vector<2x128xf32>
    %180 = vector.extract_strided_slice %179 {offsets = [0, 0], sizes = [2, 32], strides = [1, 1]} : vector<2x128xf32> to vector<2x32xf32>
    %181 = vector.extract_strided_slice %179 {offsets = [0, 32], sizes = [2, 32], strides = [1, 1]} : vector<2x128xf32> to vector<2x32xf32>
    %182 = vector.extract_strided_slice %179 {offsets = [0, 64], sizes = [2, 32], strides = [1, 1]} : vector<2x128xf32> to vector<2x32xf32>
    %183 = vector.extract_strided_slice %179 {offsets = [0, 96], sizes = [2, 32], strides = [1, 1]} : vector<2x128xf32> to vector<2x32xf32>
    %184 = arith.mulf %181, %150 : vector<2x32xf32>
    %185 = arith.mulf %180, %182 : vector<2x32xf32>
    %186 = arith.addf %184, %185 : vector<2x32xf32>
    %187 = math.tanh %186 : vector<2x32xf32>
    %188 = arith.mulf %183, %187 : vector<2x32xf32>
    %189 = arith.truncf %188 : vector<2x32xf32> to vector<2x32xbf16>
    %cst_31 = arith.constant dense<0.000000e+00> : vector<2x128xf32>
    %190 = tpu.matmul %189, %3, %cst_31 {dimension_numbers = #tpu.dot_dimension_numbers<[1], [0], [0], [1], [0, 0, 1, 1], [], []>} : vector<2x32xbf16>, vector<32x128xbf16>, vector<2x128xf32> -> vector<2x128xf32>
    %191 = arith.truncf %171 : vector<2x32xf32> to vector<2x32xbf16>
    %cst_32 = arith.constant dense<0.000000e+00> : vector<2x128xf32>
    %192 = tpu.matmul %191, %5, %cst_32 {dimension_numbers = #tpu.dot_dimension_numbers<[1], [0], [0], [1], [0, 0, 1, 1], [], []>} : vector<2x32xbf16>, vector<32x128xbf16>, vector<2x128xf32> -> vector<2x128xf32>
    %193 = arith.addf %190, %192 : vector<2x128xf32>
    %194 = arith.addf %193, %8 : vector<2x128xf32>
    %195 = arith.mulf %23, %194 : vector<2x128xf32>
    %196 = math.tanh %195 : vector<2x128xf32>
    %197 = arith.mulf %23, %196 : vector<2x128xf32>
    %198 = arith.addf %197, %26 : vector<2x128xf32>
    %199 = vector.extract_strided_slice %198 {offsets = [0, 0], sizes = [2, 32], strides = [1, 1]} : vector<2x128xf32> to vector<2x32xf32>
    %200 = vector.extract_strided_slice %198 {offsets = [0, 32], sizes = [2, 32], strides = [1, 1]} : vector<2x128xf32> to vector<2x32xf32>
    %201 = vector.extract_strided_slice %198 {offsets = [0, 64], sizes = [2, 32], strides = [1, 1]} : vector<2x128xf32> to vector<2x32xf32>
    %202 = vector.extract_strided_slice %198 {offsets = [0, 96], sizes = [2, 32], strides = [1, 1]} : vector<2x128xf32> to vector<2x32xf32>
    %203 = arith.mulf %200, %169 : vector<2x32xf32>
    %204 = arith.mulf %199, %201 : vector<2x32xf32>
    %205 = arith.addf %203, %204 : vector<2x32xf32>
    %206 = math.tanh %205 : vector<2x32xf32>
    %207 = arith.mulf %202, %206 : vector<2x32xf32>
    %208 = vector.extract_strided_slice %14 {offsets = [10, 0], sizes = [2, 128], strides = [1, 1]} : vector<16x128xf32> to vector<2x128xf32>
    %209 = arith.truncf %188 : vector<2x32xf32> to vector<2x32xbf16>
    %cst_33 = arith.constant dense<0.000000e+00> : vector<2x128xf32>
    %210 = tpu.matmul %209, %1, %cst_33 {dimension_numbers = #tpu.dot_dimension_numbers<[1], [0], [0], [1], [0, 0, 1, 1], [], []>} : vector<2x32xbf16>, vector<32x128xbf16>, vector<2x128xf32> -> vector<2x128xf32>
    %211 = arith.addf %208, %210 : vector<2x128xf32>
    %212 = arith.mulf %23, %211 : vector<2x128xf32>
    %213 = math.tanh %212 : vector<2x128xf32>
    %214 = arith.mulf %23, %213 : vector<2x128xf32>
    %215 = arith.addf %214, %26 : vector<2x128xf32>
    %216 = vector.extract_strided_slice %215 {offsets = [0, 0], sizes = [2, 32], strides = [1, 1]} : vector<2x128xf32> to vector<2x32xf32>
    %217 = vector.extract_strided_slice %215 {offsets = [0, 32], sizes = [2, 32], strides = [1, 1]} : vector<2x128xf32> to vector<2x32xf32>
    %218 = vector.extract_strided_slice %215 {offsets = [0, 64], sizes = [2, 32], strides = [1, 1]} : vector<2x128xf32> to vector<2x32xf32>
    %219 = vector.extract_strided_slice %215 {offsets = [0, 96], sizes = [2, 32], strides = [1, 1]} : vector<2x128xf32> to vector<2x32xf32>
    %220 = arith.mulf %217, %186 : vector<2x32xf32>
    %221 = arith.mulf %216, %218 : vector<2x32xf32>
    %222 = arith.addf %220, %221 : vector<2x32xf32>
    %223 = math.tanh %222 : vector<2x32xf32>
    %224 = arith.mulf %219, %223 : vector<2x32xf32>
    %225 = arith.truncf %224 : vector<2x32xf32> to vector<2x32xbf16>
    %cst_34 = arith.constant dense<0.000000e+00> : vector<2x128xf32>
    %226 = tpu.matmul %225, %3, %cst_34 {dimension_numbers = #tpu.dot_dimension_numbers<[1], [0], [0], [1], [0, 0, 1, 1], [], []>} : vector<2x32xbf16>, vector<32x128xbf16>, vector<2x128xf32> -> vector<2x128xf32>
    %227 = arith.truncf %207 : vector<2x32xf32> to vector<2x32xbf16>
    %cst_35 = arith.constant dense<0.000000e+00> : vector<2x128xf32>
    %228 = tpu.matmul %227, %5, %cst_35 {dimension_numbers = #tpu.dot_dimension_numbers<[1], [0], [0], [1], [0, 0, 1, 1], [], []>} : vector<2x32xbf16>, vector<32x128xbf16>, vector<2x128xf32> -> vector<2x128xf32>
    %229 = arith.addf %226, %228 : vector<2x128xf32>
    %230 = arith.addf %229, %8 : vector<2x128xf32>
    %231 = arith.mulf %23, %230 : vector<2x128xf32>
    %232 = math.tanh %231 : vector<2x128xf32>
    %233 = arith.mulf %23, %232 : vector<2x128xf32>
    %234 = arith.addf %233, %26 : vector<2x128xf32>
    %235 = vector.extract_strided_slice %234 {offsets = [0, 0], sizes = [2, 32], strides = [1, 1]} : vector<2x128xf32> to vector<2x32xf32>
    %236 = vector.extract_strided_slice %234 {offsets = [0, 32], sizes = [2, 32], strides = [1, 1]} : vector<2x128xf32> to vector<2x32xf32>
    %237 = vector.extract_strided_slice %234 {offsets = [0, 64], sizes = [2, 32], strides = [1, 1]} : vector<2x128xf32> to vector<2x32xf32>
    %238 = vector.extract_strided_slice %234 {offsets = [0, 96], sizes = [2, 32], strides = [1, 1]} : vector<2x128xf32> to vector<2x32xf32>
    %239 = arith.mulf %236, %205 : vector<2x32xf32>
    %240 = arith.mulf %235, %237 : vector<2x32xf32>
    %241 = arith.addf %239, %240 : vector<2x32xf32>
    %242 = math.tanh %241 : vector<2x32xf32>
    %243 = arith.mulf %238, %242 : vector<2x32xf32>
    %244 = vector.extract_strided_slice %14 {offsets = [12, 0], sizes = [2, 128], strides = [1, 1]} : vector<16x128xf32> to vector<2x128xf32>
    %245 = arith.truncf %224 : vector<2x32xf32> to vector<2x32xbf16>
    %cst_36 = arith.constant dense<0.000000e+00> : vector<2x128xf32>
    %246 = tpu.matmul %245, %1, %cst_36 {dimension_numbers = #tpu.dot_dimension_numbers<[1], [0], [0], [1], [0, 0, 1, 1], [], []>} : vector<2x32xbf16>, vector<32x128xbf16>, vector<2x128xf32> -> vector<2x128xf32>
    %247 = arith.addf %244, %246 : vector<2x128xf32>
    %248 = arith.mulf %23, %247 : vector<2x128xf32>
    %249 = math.tanh %248 : vector<2x128xf32>
    %250 = arith.mulf %23, %249 : vector<2x128xf32>
    %251 = arith.addf %250, %26 : vector<2x128xf32>
    %252 = vector.extract_strided_slice %251 {offsets = [0, 0], sizes = [2, 32], strides = [1, 1]} : vector<2x128xf32> to vector<2x32xf32>
    %253 = vector.extract_strided_slice %251 {offsets = [0, 32], sizes = [2, 32], strides = [1, 1]} : vector<2x128xf32> to vector<2x32xf32>
    %254 = vector.extract_strided_slice %251 {offsets = [0, 64], sizes = [2, 32], strides = [1, 1]} : vector<2x128xf32> to vector<2x32xf32>
    %255 = vector.extract_strided_slice %251 {offsets = [0, 96], sizes = [2, 32], strides = [1, 1]} : vector<2x128xf32> to vector<2x32xf32>
    %256 = arith.mulf %253, %222 : vector<2x32xf32>
    %257 = arith.mulf %252, %254 : vector<2x32xf32>
    %258 = arith.addf %256, %257 : vector<2x32xf32>
    %259 = math.tanh %258 : vector<2x32xf32>
    %260 = arith.mulf %255, %259 : vector<2x32xf32>
    %261 = arith.truncf %260 : vector<2x32xf32> to vector<2x32xbf16>
    %cst_37 = arith.constant dense<0.000000e+00> : vector<2x128xf32>
    %262 = tpu.matmul %261, %3, %cst_37 {dimension_numbers = #tpu.dot_dimension_numbers<[1], [0], [0], [1], [0, 0, 1, 1], [], []>} : vector<2x32xbf16>, vector<32x128xbf16>, vector<2x128xf32> -> vector<2x128xf32>
    %263 = arith.truncf %243 : vector<2x32xf32> to vector<2x32xbf16>
    %cst_38 = arith.constant dense<0.000000e+00> : vector<2x128xf32>
    %264 = tpu.matmul %263, %5, %cst_38 {dimension_numbers = #tpu.dot_dimension_numbers<[1], [0], [0], [1], [0, 0, 1, 1], [], []>} : vector<2x32xbf16>, vector<32x128xbf16>, vector<2x128xf32> -> vector<2x128xf32>
    %265 = arith.addf %262, %264 : vector<2x128xf32>
    %266 = arith.addf %265, %8 : vector<2x128xf32>
    %267 = arith.mulf %23, %266 : vector<2x128xf32>
    %268 = math.tanh %267 : vector<2x128xf32>
    %269 = arith.mulf %23, %268 : vector<2x128xf32>
    %270 = arith.addf %269, %26 : vector<2x128xf32>
    %271 = vector.extract_strided_slice %270 {offsets = [0, 0], sizes = [2, 32], strides = [1, 1]} : vector<2x128xf32> to vector<2x32xf32>
    %272 = vector.extract_strided_slice %270 {offsets = [0, 32], sizes = [2, 32], strides = [1, 1]} : vector<2x128xf32> to vector<2x32xf32>
    %273 = vector.extract_strided_slice %270 {offsets = [0, 64], sizes = [2, 32], strides = [1, 1]} : vector<2x128xf32> to vector<2x32xf32>
    %274 = vector.extract_strided_slice %270 {offsets = [0, 96], sizes = [2, 32], strides = [1, 1]} : vector<2x128xf32> to vector<2x32xf32>
    %275 = arith.mulf %272, %241 : vector<2x32xf32>
    %276 = arith.mulf %271, %273 : vector<2x32xf32>
    %277 = arith.addf %275, %276 : vector<2x32xf32>
    %278 = math.tanh %277 : vector<2x32xf32>
    %279 = arith.mulf %274, %278 : vector<2x32xf32>
    %280 = vector.extract_strided_slice %14 {offsets = [14, 0], sizes = [2, 128], strides = [1, 1]} : vector<16x128xf32> to vector<2x128xf32>
    %281 = arith.truncf %260 : vector<2x32xf32> to vector<2x32xbf16>
    %cst_39 = arith.constant dense<0.000000e+00> : vector<2x128xf32>
    %282 = tpu.matmul %281, %1, %cst_39 {dimension_numbers = #tpu.dot_dimension_numbers<[1], [0], [0], [1], [0, 0, 1, 1], [], []>} : vector<2x32xbf16>, vector<32x128xbf16>, vector<2x128xf32> -> vector<2x128xf32>
    %283 = arith.addf %280, %282 : vector<2x128xf32>
    %284 = arith.mulf %23, %283 : vector<2x128xf32>
    %285 = math.tanh %284 : vector<2x128xf32>
    %286 = arith.mulf %23, %285 : vector<2x128xf32>
    %287 = arith.addf %286, %26 : vector<2x128xf32>
    %288 = vector.extract_strided_slice %287 {offsets = [0, 0], sizes = [2, 32], strides = [1, 1]} : vector<2x128xf32> to vector<2x32xf32>
    %289 = vector.extract_strided_slice %287 {offsets = [0, 32], sizes = [2, 32], strides = [1, 1]} : vector<2x128xf32> to vector<2x32xf32>
    %290 = vector.extract_strided_slice %287 {offsets = [0, 64], sizes = [2, 32], strides = [1, 1]} : vector<2x128xf32> to vector<2x32xf32>
    %291 = vector.extract_strided_slice %287 {offsets = [0, 96], sizes = [2, 32], strides = [1, 1]} : vector<2x128xf32> to vector<2x32xf32>
    %292 = arith.mulf %289, %258 : vector<2x32xf32>
    %293 = arith.mulf %288, %290 : vector<2x32xf32>
    %294 = arith.addf %292, %293 : vector<2x32xf32>
    %295 = math.tanh %294 : vector<2x32xf32>
    %296 = arith.mulf %291, %295 : vector<2x32xf32>
    %297 = arith.truncf %296 : vector<2x32xf32> to vector<2x32xbf16>
    %cst_40 = arith.constant dense<0.000000e+00> : vector<2x128xf32>
    %298 = tpu.matmul %297, %3, %cst_40 {dimension_numbers = #tpu.dot_dimension_numbers<[1], [0], [0], [1], [0, 0, 1, 1], [], []>} : vector<2x32xbf16>, vector<32x128xbf16>, vector<2x128xf32> -> vector<2x128xf32>
    %299 = arith.truncf %279 : vector<2x32xf32> to vector<2x32xbf16>
    %cst_41 = arith.constant dense<0.000000e+00> : vector<2x128xf32>
    %300 = tpu.matmul %299, %5, %cst_41 {dimension_numbers = #tpu.dot_dimension_numbers<[1], [0], [0], [1], [0, 0, 1, 1], [], []>} : vector<2x32xbf16>, vector<32x128xbf16>, vector<2x128xf32> -> vector<2x128xf32>
    %301 = arith.addf %298, %300 : vector<2x128xf32>
    %302 = arith.addf %301, %8 : vector<2x128xf32>
    %303 = arith.mulf %23, %302 : vector<2x128xf32>
    %304 = math.tanh %303 : vector<2x128xf32>
    %305 = arith.mulf %23, %304 : vector<2x128xf32>
    %306 = arith.addf %305, %26 : vector<2x128xf32>
    %307 = vector.extract_strided_slice %306 {offsets = [0, 0], sizes = [2, 32], strides = [1, 1]} : vector<2x128xf32> to vector<2x32xf32>
    %308 = vector.extract_strided_slice %306 {offsets = [0, 32], sizes = [2, 32], strides = [1, 1]} : vector<2x128xf32> to vector<2x32xf32>
    %309 = vector.extract_strided_slice %306 {offsets = [0, 64], sizes = [2, 32], strides = [1, 1]} : vector<2x128xf32> to vector<2x32xf32>
    %310 = vector.extract_strided_slice %306 {offsets = [0, 96], sizes = [2, 32], strides = [1, 1]} : vector<2x128xf32> to vector<2x32xf32>
    %311 = arith.mulf %308, %277 : vector<2x32xf32>
    %312 = arith.mulf %307, %309 : vector<2x32xf32>
    %313 = arith.addf %311, %312 : vector<2x32xf32>
    %314 = math.tanh %313 : vector<2x32xf32>
    %315 = arith.mulf %310, %314 : vector<2x32xf32>
    %c0_42 = arith.constant 0 : index
    %c0_43 = arith.constant 0 : index
    %316 = vector.load %arg7[%c0_42, %c0_43] : memref<32x16xf32, #tpu.memory_space<vmem>>, vector<32x16xf32>
    %cst_44 = arith.constant dense<0.000000e+00> : vector<2x16xf32>
    %317 = tpu.matmul %315, %316, %cst_44 {dimension_numbers = #tpu.dot_dimension_numbers<[1], [0], [0], [1], [0, 0, 1, 1], [], []>} : vector<2x32xf32>, vector<32x16xf32>, vector<2x16xf32> -> vector<2x16xf32>
    %c0_45 = arith.constant 0 : index
    %c0_46 = arith.constant 0 : index
    %318 = vector.load %arg8[%c0_45, %c0_46] : memref<1x16xf32, #tpu.memory_space<vmem>>, vector<1x16xf32>
    %319 = vector.broadcast %318 : vector<1x16xf32> to vector<2x16xf32>
    %320 = arith.addf %317, %319 : vector<2x16xf32>
    %cst_47 = arith.constant 0.000000e+00 : f32
    %321 = vector.broadcast %cst_47 : f32 to vector<2x16xf32>
    %322 = arith.maximumf %320, %321 : vector<2x16xf32>
    %c0_48 = arith.constant 0 : index
    %c0_49 = arith.constant 0 : index
    %323 = vector.load %arg9[%c0_48, %c0_49] : memref<16x16xf32, #tpu.memory_space<vmem>>, vector<16x16xf32>
    %cst_50 = arith.constant dense<0.000000e+00> : vector<2x16xf32>
    %324 = tpu.matmul %322, %323, %cst_50 {dimension_numbers = #tpu.dot_dimension_numbers<[1], [0], [0], [1], [0, 0, 1, 1], [], []>} : vector<2x16xf32>, vector<16x16xf32>, vector<2x16xf32> -> vector<2x16xf32>
    %c0_51 = arith.constant 0 : index
    %c0_52 = arith.constant 0 : index
    %325 = vector.load %arg10[%c0_51, %c0_52] : memref<1x16xf32, #tpu.memory_space<vmem>>, vector<1x16xf32>
    %326 = vector.broadcast %325 : vector<1x16xf32> to vector<2x16xf32>
    %327 = arith.addf %324, %326 : vector<2x16xf32>
    %328 = arith.negf %327 : vector<2x16xf32>
    %329 = math.exp %328 : vector<2x16xf32>
    %cst_53 = arith.constant 1.000000e+00 : f32
    %330 = vector.broadcast %cst_53 : f32 to vector<2x16xf32>
    %331 = arith.addf %330, %329 : vector<2x16xf32>
    %332 = arith.divf %330, %331 : vector<2x16xf32>
    %c0_54 = arith.constant 0 : index
    %c0_55 = arith.constant 0 : index
    %333 = vector.load %arg11[%c0_54, %c0_55] : memref<2x16xf32, #tpu.memory_space<vmem>>, vector<2x16xf32>
    tpu.vector_store %arg11[%c0_54, %c0_55], %332 {strides = array<i32>} : memref<2x16xf32, #tpu.memory_space<vmem>>, vector<2x16xf32>,
    %334 = tpu.concatenate %296, %315, %294, %313 in 1 : vector<2x32xf32>, vector<2x32xf32>, vector<2x32xf32>, vector<2x32xf32> -> vector<2x128xf32>
    %c0_56 = arith.constant 0 : index
    %c0_57 = arith.constant 0 : index
    %335 = vector.load %arg12[%c0_56, %c0_57] : memref<2x128xf32, #tpu.memory_space<vmem>>, vector<2x128xf32>
    tpu.vector_store %arg12[%c0_56, %c0_57], %334 {strides = array<i32>} : memref<2x128xf32, #tpu.memory_space<vmem>>, vector<2x128xf32>,
    return
  }
}

</mosaic_0001>

<llo_original>
// kernel: tpu_custom_call.1
$region0: #{tpu_custom_call.1}
  #allocation0 [shape = 'u32[]', space=smem, size = 0x4, offset = 0x4, fixed_abs, tag = 'smem constant byte address 0x4 - core index']
  #allocation1 [shape = 'u32[144,128]{1,0:T(1,128)}', space=vmem, size = 0x12000, scoped, tag = 'internal scratch']
  %s0 = inlined_call_operand.hbm [shape: f32[16,16], index: 0, kind: input, shape index: {}]
  %s1 = inlined_call_operand.hbm [shape: f32[16,128], index: 1, kind: input, shape index: {}]
  %s2 = inlined_call_operand.vmem [shape: f32[32,128], index: 2, kind: input, shape index: {}]
  %s3 = inlined_call_operand.vmem [shape: f32[1,128], index: 3, kind: input, shape index: {}]
  %s4 = inlined_call_operand.hbm [shape: f32[32,128], index: 4, kind: input, shape index: {}]
  %s5 = inlined_call_operand.vmem [shape: f32[32,128], index: 5, kind: input, shape index: {}]
  %s6 = inlined_call_operand.vmem [shape: f32[1,128], index: 6, kind: input, shape index: {}]
  %s7 = inlined_call_operand.vmem [shape: f32[32,16], index: 7, kind: input, shape index: {}]
  %s8 = inlined_call_operand.hbm [shape: f32[1,16], index: 8, kind: input, shape index: {}]
  %s9 = inlined_call_operand.vmem [shape: f32[16,16], index: 9, kind: input, shape index: {}]
  %s10 = inlined_call_operand.vmem [shape: f32[1,16], index: 10, kind: input, shape index: {}]
  %s11 = inlined_call_operand.hbm [shape: f32[2,16], index: 11, kind: output, shape index: {0}]
  %s12 = inlined_call_operand.hbm [shape: f32[2,128], index: 12, kind: output, shape index: {1}]
  %13 = xla_tuple %s11, %s12
  %s14 = sld [smem:[#allocation0]]
  $region78: #{tpu_custom_call.1} parent=0
    _
  %s16 = ssub.s32 1, %s14
  %s17 = scalar_select 0, %s16, %s14
  $region1: #{tpu_custom_call.1} parent=0
    #allocation2 [shape = 'u8[8192]{0}', space=vmem, size = 0x2000, scoped, tag = 'input window, operand 0, single buffered']
    #allocation3 [shape = 's32[1]{0}', space=sflag, size = 0x4, scoped, tag = 'scoped memory for tpu_custom_call.1']
    #allocation4 [shape = 's32[1]{0}', space=sflag, size = 0x4, scoped, tag = 'scoped memory for tpu_custom_call.1']
    #allocation5 [shape = 'u8[8192]{0}', space=vmem, size = 0x2000, scoped, tag = 'input window, operand 1, single buffered']
    #allocation6 [shape = 's32[1]{0}', space=sflag, size = 0x4, scoped, tag = 'scoped memory for tpu_custom_call.1']
    #allocation7 [shape = 'u8[16384]{0}', space=vmem, size = 0x4000, scoped, tag = 'input window, operand 4, single buffered']
    #allocation8 [shape = 'u8[512]{0}', space=vmem, size = 0x400, scoped, tag = 'input window, operand 8, single buffered']
    #allocation9 [shape = 's32[1]{0}', space=sflag, size = 0x4, scoped, tag = 'scoped memory for tpu_custom_call.1']
    #allocation10 [shape = 'u8[1024]{0}', space=vmem, size = 0x400, scoped, tag = 'output window, operand 0, single buffered']
    #allocation11 [shape = 'u8[1024]{0}', space=vmem, size = 0x400, scoped, tag = 'output window, operand 1, single buffered']
    #allocation12 [shape = 's32[1]{0}', space=sflag, size = 0x4, scoped, tag = 'scoped memory for tpu_custom_call.1']
    %18 = vsyncpa [#allocation3], 0
    %19 = vsyncpa [#allocation6], 0
    %20 = vsyncpa [#allocation9], 0
    %21 = vsyncpa [#allocation4], 0
    %22 = vsyncpa [#allocation12], 0
    // Predicated region
    $region2: #{tpu_custom_call.1} parent=1 // pred_check
      _
    $region3: #{tpu_custom_call.1} parent=1 // pred_check_branch
      %24 = sbr.rel (0) target = $region5
    $region4: #{tpu_custom_call.1} parent=1 // pred_region
      %s26 = ssub.s32 256, 256
      %27 = vsyncadd [#allocation3], %s26
      %s28 = sshll.u32 [#allocation2], 4
      %s29 = int_to_ptr.vmem [resolvable:$true] %s28
      %34 = dma.hbm_to_vmem [thread:$0]  %s0, 256, %s29, [#allocation3], 128, 128, 8
    $region5: #{tpu_custom_call.1} parent=1 // pred_fallthru
      _
    // Predicated region
    $region6: #{tpu_custom_call.1} parent=1 // pred_check
      _
    $region7: #{tpu_custom_call.1} parent=1 // pred_check_branch
      %36 = sbr.rel (0) target = $region9
    $region8: #{tpu_custom_call.1} parent=1 // pred_region
      %s38 = ssub.s32 256, 256
      %39 = vsyncadd [#allocation6], %s38
      %s40 = sshll.u32 [#allocation5], 4
      %s41 = int_to_ptr.vmem [resolvable:$true] %s40
      %46 = dma.hbm_to_vmem [thread:$0]  %s1, 256, %s41, [#allocation6], 128, 128, 8
    $region9: #{tpu_custom_call.1} parent=1 // pred_fallthru
      _
    // Predicated region
    $region10: #{tpu_custom_call.1} parent=1 // pred_check
      _
    $region11: #{tpu_custom_call.1} parent=1 // pred_check_branch
      %48 = sbr.rel (0) target = $region13
    $region12: #{tpu_custom_call.1} parent=1 // pred_region
      _
    $region13: #{tpu_custom_call.1} parent=1 // pred_fallthru
      _
    // Predicated region
    $region14: #{tpu_custom_call.1} parent=1 // pred_check
      _
    $region15: #{tpu_custom_call.1} parent=1 // pred_check_branch
      %50 = sbr.rel (0) target = $region17
    $region16: #{tpu_custom_call.1} parent=1 // pred_region
      _
    $region17: #{tpu_custom_call.1} parent=1 // pred_fallthru
      _
    // Predicated region
    $region18: #{tpu_custom_call.1} parent=1 // pred_check
      _
    $region19: #{tpu_custom_call.1} parent=1 // pred_check_branch
      %52 = sbr.rel (0) target = $region21
    $region20: #{tpu_custom_call.1} parent=1 // pred_region
      %s54 = ssub.s32 512, 512
      %55 = vsyncadd [#allocation6], %s54
      %s56 = sshll.u32 [#allocation7], 4
      %s57 = int_to_ptr.vmem [resolvable:$true] %s56
      %62 = dma.hbm_to_vmem [thread:$0]  %s4, 512, %s57, [#allocation6], 128, 128, 8
    $region21: #{tpu_custom_call.1} parent=1 // pred_fallthru
      _
    // Predicated region
    $region22: #{tpu_custom_call.1} parent=1 // pred_check
      _
    $region23: #{tpu_custom_call.1} parent=1 // pred_check_branch
      %64 = sbr.rel (0) target = $region25
    $region24: #{tpu_custom_call.1} parent=1 // pred_region
      _
    $region25: #{tpu_custom_call.1} parent=1 // pred_fallthru
      _
    // Predicated region
    $region26: #{tpu_custom_call.1} parent=1 // pred_check
      _
    $region27: #{tpu_custom_call.1} parent=1 // pred_check_branch
      %66 = sbr.rel (0) target = $region29
    $region28: #{tpu_custom_call.1} parent=1 // pred_region
      _
    $region29: #{tpu_custom_call.1} parent=1 // pred_fallthru
      _
    // Predicated region
    $region30: #{tpu_custom_call.1} parent=1 // pred_check
      _
    $region31: #{tpu_custom_call.1} parent=1 // pred_check_branch
      %68 = sbr.rel (0) target = $region33
    $region32: #{tpu_custom_call.1} parent=1 // pred_region
      _
    $region33: #{tpu_custom_call.1} parent=1 // pred_fallthru
      _
    // Predicated region
    $region34: #{tpu_custom_call.1} parent=1 // pred_check
      _
    $region35: #{tpu_custom_call.1} parent=1 // pred_check_branch
      %70 = sbr.rel (0) target = $region37
    $region36: #{tpu_custom_call.1} parent=1 // pred_region
      %s72 = ssub.s32 16, 16
      %73 = vsyncadd [#allocation9], %s72
      %s75 = sshll.u32 [#allocation8], 4
      %s76 = int_to_ptr.vmem [resolvable:$true] %s75
      %78 = dma.hbm_to_vmem [thread:$0]  %s8, 16, %s76, [#allocation9]
    $region37: #{tpu_custom_call.1} parent=1 // pred_fallthru
      _
    // Predicated region
    $region38: #{tpu_custom_call.1} parent=1 // pred_check
      _
    $region39: #{tpu_custom_call.1} parent=1 // pred_check_branch
      %80 = sbr.rel (0) target = $region41
    $region40: #{tpu_custom_call.1} parent=1 // pred_region
      _
    $region41: #{tpu_custom_call.1} parent=1 // pred_fallthru
      _
    // Predicated region
    $region42: #{tpu_custom_call.1} parent=1 // pred_check
      _
    $region43: #{tpu_custom_call.1} parent=1 // pred_check_branch
      %82 = sbr.rel (0) target = $region45
    $region44: #{tpu_custom_call.1} parent=1 // pred_region
      _
    $region45: #{tpu_custom_call.1} parent=1 // pred_fallthru
      _
    // Predicated region
    $region46: #{tpu_custom_call.1} parent=1 // pred_check
      _
    $region47: #{tpu_custom_call.1} parent=1 // pred_check_branch
      %84 = sbr.rel (0) target = $region49
    $region48: #{tpu_custom_call.1} parent=1 // pred_region
      %85 = dma.done [#allocation3], 256
    $region49: #{tpu_custom_call.1} parent=1 // pred_fallthru
      _
    // Predicated region
    $region50: #{tpu_custom_call.1} parent=1 // pred_check
      _
    $region51: #{tpu_custom_call.1} parent=1 // pred_check_branch
      %87 = sbr.rel (0) target = $region53
    $region52: #{tpu_custom_call.1} parent=1 // pred_region
      %88 = dma.done [#allocation6], 256
    $region53: #{tpu_custom_call.1} parent=1 // pred_fallthru
      _
    // Predicated region
    $region54: #{tpu_custom_call.1} parent=1 // pred_check
      _
    $region55: #{tpu_custom_call.1} parent=1 // pred_check_branch
      %90 = sbr.rel (0) target = $region57
    $region56: #{tpu_custom_call.1} parent=1 // pred_region
      %91 = dma.done [#allocation6], 512
    $region57: #{tpu_custom_call.1} parent=1 // pred_fallthru
      _
    // Predicated region
    $region58: #{tpu_custom_call.1} parent=1 // pred_check
      _
    $region59: #{tpu_custom_call.1} parent=1 // pred_check_branch
      %93 = sbr.rel (0) target = $region61
    $region60: #{tpu_custom_call.1} parent=1 // pred_region
      %94 = dma.done [#allocation9], 16
    $region61: #{tpu_custom_call.1} parent=1 // pred_fallthru
      _
    %v96 = vld [vmem:[%s2] sm:$0xff]
    %v97 = vld [vmem:[%s2 + $0x8] sm:$0xff]
    %v98 = vld [vmem:[%s2 + $0x10] sm:$0xff]
    %v99 = vld [vmem:[%s2 + $0x18] sm:$0xff]
    %v100 = vpack.c.bf16 %v97, %v96
    %v101 = vpack.c.bf16 %v99, %v98
    %v102 = vld [vmem:[#allocation7] sm:$0xff]
    %v103 = vld [vmem:[#allocation7 + $0x8] sm:$0xff]
    %v104 = vld [vmem:[#allocation7 + $0x10] sm:$0xff]
    %v105 = vld [vmem:[#allocation7 + $0x18] sm:$0xff]
    %v106 = vpack.c.bf16 %v103, %v102
    %v107 = vpack.c.bf16 %v105, %v104
    %v108 = vld [vmem:[%s5] sm:$0xff]
    %v109 = vld [vmem:[%s5 + $0x8] sm:$0xff]
    %v110 = vld [vmem:[%s5 + $0x10] sm:$0xff]
    %v111 = vld [vmem:[%s5 + $0x18] sm:$0xff]
    %v112 = vpack.c.bf16 %v109, %v108
    %v113 = vpack.c.bf16 %v111, %v110
    %v114 = vld [vmem:[%s6] sm:$0x1]
    %v116 = vlaneseq
    %v117 = vshrl.u32 %v116, 7
    %v118 = vsub.s32 0, %v117
    %v119 = vrot.slane %v114, %v118
    %v121 = vld [vmem:[#allocation2] sm:$0xff]
    %v122 = vld [vmem:[#allocation2 + $0x8] sm:$0xff]
    %v123 = vld [vmem:[#allocation5] sm:$0xff]
    %v124 = vld [vmem:[#allocation5 + $0x8] sm:$0xff]
    %v125 = vld [vmem:[%s3] sm:$0x1]
    %v127 = vlaneseq
    %v128 = vshrl.u32 %v127, 7
    %v129 = vsub.s32 0, %v128
    %v130 = vrot.slane %v125, %v129
    %vm132 = vcmask 130048
    %v134 = vsel %vm132, %v121, 0
    %v137 = vsel %vm132, %v122, 0
    %139 = vmatprep.subr.mxu0 0.0
    %140 = vmatpush1.msra.mxu0 %v123
    %141 = vmatprep.subr.mxu0 0.0
    %142 = vmatpush1.msra.mxu0 %v124
    %143 = vmatprep.subr.mxu0 0.0
    %144 = vmatpush1.msra.mxu0 0.0
    %145 = vmatprep.subr.mxu0 0.0
    %146 = vmatpush1.msra.mxu0 0.0
    %147 = vmatprep.subr.mxu0 0.0
    %148 = vmatpush1.msra.mxu0 0.0
    %149 = vmatprep.subr.mxu0 0.0
    %150 = vmatpush1.msra.mxu0 0.0
    %151 = vmatprep.subr.mxu0 0.0
    %152 = vmatpush1.msra.mxu0 0.0
    %153 = vmatprep.subr.mxu0 0.0
    %154 = vmatpush1.msra.mxu0 0.0
    %155 = vmatprep.subr.mxu0 0.0
    %156 = vmatpush1.msra.mxu0 0.0
    %157 = vmatprep.subr.mxu0 0.0
    %158 = vmatpush1.msra.mxu0 0.0
    %159 = vmatprep.subr.mxu0 0.0
    %160 = vmatpush1.msra.mxu0 0.0
    %161 = vmatprep.subr.mxu0 0.0
    %162 = vmatpush1.msra.mxu0 0.0
    %163 = vmatprep.subr.mxu0 0.0
    %164 = vmatpush1.msra.mxu0 0.0
    %165 = vmatprep.subr.mxu0 0.0
    %166 = vmatpush1.msra.mxu0 0.0
    %167 = vmatprep.subr.mxu0 0.0
    %168 = vmatpush1.msra.mxu0 0.0
    %169 = vmatprep.subr.mxu0 0.0
    %170 = vmatpush1.msra.mxu0 0.0
    %171 = vmatprep.subr.mxu0 0.0
    %172 = vmatpush1.msra.mxu0 0.0
    %173 = vmatprep.subr.mxu0 0.0
    %174 = vmatpush1.msra.mxu0 0.0
    %175 = vmatprep.subr.mxu0 0.0
    %176 = vmatpush1.msra.mxu0 0.0
    %177 = vmatprep.subr.mxu0 0.0
    %178 = vmatpush1.msra.mxu0 0.0
    %179 = vmatprep.subr.mxu0 0.0
    %180 = vmatpush1.msra.mxu0 0.0
    %181 = vmatprep.subr.mxu0 0.0
    %182 = vmatpush1.msra.mxu0 0.0
    %183 = vmatprep.subr.mxu0 0.0
    %184 = vmatpush1.msra.mxu0 0.0
    %185 = vmatprep.subr.mxu0 0.0
    %186 = vmatpush1.msra.mxu0 0.0
    %187 = vmatprep.subr.mxu0 0.0
    %188 = vmatpush1.msra.mxu0 0.0
    %189 = vmatprep.subr.mxu0 0.0
    %190 = vmatpush1.msra.mxu0 0.0
    %191 = vmatprep.subr.mxu0 0.0
    %192 = vmatpush1.msra.mxu0 0.0
    %193 = vmatprep.subr.mxu0 0.0
    %194 = vmatpush1.msra.mxu0 0.0
    %195 = vmatprep.subr.mxu0 0.0
    %196 = vmatpush1.msra.mxu0 0.0
    %197 = vmatprep.subr.mxu0 0.0
    %198 = vmatpush1.msra.mxu0 0.0
    %199 = vmatprep.subr.mxu0 0.0
    %200 = vmatpush1.msra.mxu0 0.0
    %201 = vmatprep.subr.mxu0 0.0
    %202 = vmatpush1.msra.mxu0 0.0
    %203 = vmatprep.mubr.f32.mxu0 0.0
    %204 = vmatmul.mubr.f32.gmra.mrb[0].mxu0 %v134
    %v205 = vpop.f32.mrb[0].mxu0
    %v206 = vadd.f32 %v130, %v205
    %v207 = vpop.f32.mrb[0].mxu0
    %208 = vmatprep.mubr.f32.mxu0 0.0
    %209 = vmatmul.mubr.f32.gmra.mrb[0].mxu0 %v137
    %v210 = vpop.f32.mrb[0].mxu0
    %v211 = vadd.f32 %v130, %v210
    %v212 = vpop.f32.mrb[0].mxu0
    %213 = vdwg.mxu0
    %v214 = vlaneseq
    %v215 = vand.u32 %v214, 127
    %vm216 = vcmp.ge.s32.totalorder %v215, 64
    %vm217 = vcmp.lt.s32.totalorder %v215, 96
    %vm218 = vmand %vm216, %vm217
    %v219 = vsel %vm218, 1.0, 0.5
    %v220 = vsel %vm218, 0.0, 0.5
    %vm221 = vcmask 261120
    %v223 = vsel %vm221, 0, 0
    %225 = vmatprep.subr.bf16.mxu0 0
    %226 = vmatpush1.bf16.msra.mxu0 %v100
    %227 = vmatprep.subr.bf16.mxu0 0
    %228 = vmatpush1.bf16.msra.mxu0 %v101
    %229 = vmatprep.subr.bf16.mxu0 0
    %230 = vmatpush1.bf16.msra.mxu0 0
    %231 = vmatprep.subr.bf16.mxu0 0
    %232 = vmatpush1.bf16.msra.mxu0 0
    %233 = vmatprep.subr.bf16.mxu0 0
    %234 = vmatpush1.bf16.msra.mxu0 0
    %235 = vmatprep.subr.bf16.mxu0 0
    %236 = vmatpush1.bf16.msra.mxu0 0
    %237 = vmatprep.subr.bf16.mxu0 0
    %238 = vmatpush1.bf16.msra.mxu0 0
    %239 = vmatprep.subr.bf16.mxu0 0
    %240 = vmatpush1.bf16.msra.mxu0 0
    %241 = vmatprep.subr.bf16.mxu0 0
    %242 = vmatpush1.bf16.msra.mxu0 0
    %243 = vmatprep.subr.bf16.mxu0 0
    %244 = vmatpush1.bf16.msra.mxu0 0
    %245 = vmatprep.subr.bf16.mxu0 0
    %246 = vmatpush1.bf16.msra.mxu0 0
    %247 = vmatprep.subr.bf16.mxu0 0
    %248 = vmatpush1.bf16.msra.mxu0 0
    %249 = vmatprep.subr.bf16.mxu0 0
    %250 = vmatpush1.bf16.msra.mxu0 0
    %251 = vmatprep.subr.bf16.mxu0 0
    %252 = vmatpush1.bf16.msra.mxu0 0
    %253 = vmatprep.subr.bf16.mxu0 0
    %254 = vmatpush1.bf16.msra.mxu0 0
    %255 = vmatprep.subr.bf16.mxu0 0
    %256 = vmatpush1.bf16.msra.mxu0 0
    %257 = vmatprep.mubr.bf16.mxu0 0
    %258 = vmatmul.mubr.bf16.gmra.mrb[0].mxu0 %v223
    %v259 = vpop.f32.mrb[0].mxu0
    %v260 = vadd.f32 0.0, %v259
    %v261 = vpop.f32.mrb[0].mxu0
    %v262 = vpop.f32.mrb[0].mxu0
    %v263 = vpop.f32.mrb[0].mxu0
    %264 = vdwg.mxu0
    %v265 = vadd.f32 %v206, %v260
    %v266 = vmul.f32 %v219, %v265
    %v267 = vtanh.pop %v266
    %v268 = vmul.f32 %v219, %v267
    %v269 = vadd.f32 %v268, %v220
    %v270 = vmul.f32 %v269, 0.0
    %272 = vrot.lane.b32.xlu0 %v269, 64
    %v273 = vpop.permute.xlu0 %272
    %v275 = vmul.f32 %v269, %v273
    %277 = vrot.lane.b32.xlu0 %v275, 32
    %v278 = vpop.permute.xlu0 %277
    %v280 = vadd.f32 %v270, %v278
    %v281 = vtanh.pop %v280
    %283 = vrot.lane.b32.xlu0 %v281, 64
    %v284 = vpop.permute.xlu0 %283
    %v286 = vmul.f32 %v269, %v284
    %v287 = vpack.c.bf16 %v286, %v286
    %288 = vmatprep.subr.bf16.mxu0 0
    %289 = vmatpush1.bf16.msra.mxu0 %v112
    %290 = vmatprep.subr.bf16.mxu0 0
    %291 = vmatpush1.bf16.msra.mxu0 %v113
    %292 = vmatprep.subr.bf16.mxu0 0
    %293 = vmatpush1.bf16.msra.mxu0 0
    %294 = vmatprep.subr.bf16.mxu0 0
    %295 = vmatpush1.bf16.msra.mxu0 0
    %296 = vmatprep.subr.bf16.mxu0 0
    %297 = vmatpush1.bf16.msra.mxu0 0
    %298 = vmatprep.subr.bf16.mxu0 0
    %299 = vmatpush1.bf16.msra.mxu0 0
    %300 = vmatprep.subr.bf16.mxu0 0
    %301 = vmatpush1.bf16.msra.mxu0 0
    %302 = vmatprep.subr.bf16.mxu0 0
    %303 = vmatpush1.bf16.msra.mxu0 0
    %304 = vmatprep.subr.bf16.mxu0 0
    %305 = vmatpush1.bf16.msra.mxu0 0
    %306 = vmatprep.subr.bf16.mxu0 0
    %307 = vmatpush1.bf16.msra.mxu0 0
    %308 = vmatprep.subr.bf16.mxu0 0
    %309 = vmatpush1.bf16.msra.mxu0 0
    %310 = vmatprep.subr.bf16.mxu0 0
    %311 = vmatpush1.bf16.msra.mxu0 0
    %312 = vmatprep.subr.bf16.mxu0 0
    %313 = vmatpush1.bf16.msra.mxu0 0
    %314 = vmatprep.subr.bf16.mxu0 0
    %315 = vmatpush1.bf16.msra.mxu0 0
    %316 = vmatprep.subr.bf16.mxu0 0
    %317 = vmatpush1.bf16.msra.mxu0 0
    %318 = vmatprep.subr.bf16.mxu0 0
    %319 = vmatpush1.bf16.msra.mxu0 0
    %320 = vmatprep.mubr.bf16.mxu0 0
    %321 = vmatmul.mubr.bf16.gmra.mrb[0].mxu0 %v223
    %v322 = vpop.f32.mrb[0].mxu0
    %v323 = vadd.f32 0.0, %v322
    %v324 = vpop.f32.mrb[0].mxu0
    %v325 = vpop.f32.mrb[0].mxu0
    %v326 = vpop.f32.mrb[0].mxu0
    %327 = vdwg.mxu0
    %329 = vrot.lane.b32.xlu0 %v287, 32
    %v330 = vpop.permute.xlu0 %329
    %v332 = vsel %vm221, %v330, 0
    %334 = vmatprep.subr.bf16.mxu0 0
    %335 = vmatpush1.bf16.msra.mxu0 %v106
    %336 = vmatprep.subr.bf16.mxu0 0
    %337 = vmatpush1.bf16.msra.mxu0 %v107
    %338 = vmatprep.subr.bf16.mxu0 0
    %339 = vmatpush1.bf16.msra.mxu0 0
    %340 = vmatprep.subr.bf16.mxu0 0
    %341 = vmatpush1.bf16.msra.mxu0 0
    %342 = vmatprep.subr.bf16.mxu0 0
    %343 = vmatpush1.bf16.msra.mxu0 0
    %344 = vmatprep.subr.bf16.mxu0 0
    %345 = vmatpush1.bf16.msra.mxu0 0
    %346 = vmatprep.subr.bf16.mxu0 0
    %347 = vmatpush1.bf16.msra.mxu0 0
    %348 = vmatprep.subr.bf16.mxu0 0
    %349 = vmatpush1.bf16.msra.mxu0 0
    %350 = vmatprep.subr.bf16.mxu0 0
    %351 = vmatpush1.bf16.msra.mxu0 0
    %352 = vmatprep.subr.bf16.mxu0 0
    %353 = vmatpush1.bf16.msra.mxu0 0
    %354 = vmatprep.subr.bf16.mxu0 0
    %355 = vmatpush1.bf16.msra.mxu0 0
    %356 = vmatprep.subr.bf16.mxu0 0
    %357 = vmatpush1.bf16.msra.mxu0 0
    %358 = vmatprep.subr.bf16.mxu0 0
    %359 = vmatpush1.bf16.msra.mxu0 0
    %360 = vmatprep.subr.bf16.mxu0 0
    %361 = vmatpush1.bf16.msra.mxu0 0
    %362 = vmatprep.subr.bf16.mxu0 0
    %363 = vmatpush1.bf16.msra.mxu0 0
    %364 = vmatprep.subr.bf16.mxu0 0
    %365 = vmatpush1.bf16.msra.mxu0 0
    %366 = vmatprep.mubr.bf16.mxu0 0
    %367 = vmatmul.mubr.bf16.gmra.mrb[0].mxu0 %v332
    %v368 = vpop.f32.mrb[0].mxu0
    %v369 = vadd.f32 %v323, %v368
    %v370 = vpop.f32.mrb[0].mxu0
    %v371 = vpop.f32.mrb[0].mxu0
    %v372 = vpop.f32.mrb[0].mxu0
    %373 = vdwg.mxu0
    %v374 = vadd.f32 %v369, %v119
    %v375 = vmul.f32 %v219, %v374
    %v376 = vtanh.pop %v375
    %v377 = vmul.f32 %v219, %v376
    %v378 = vadd.f32 %v377, %v220
    %v379 = vmul.f32 %v378, 0.0
    %381 = vrot.lane.b32.xlu0 %v378, 64
    %v382 = vpop.permute.xlu0 %381
    %v384 = vmul.f32 %v378, %v382
    %386 = vrot.lane.b32.xlu0 %v384, 32
    %v387 = vpop.permute.xlu0 %386
    %v389 = vadd.f32 %v379, %v387
    %v390 = vtanh.pop %v389
    %392 = vrot.lane.b32.xlu0 %v390, 64
    %v393 = vpop.permute.xlu0 %392
    %v395 = vmul.f32 %v378, %v393
    %396 = vmatprep.subr.bf16.mxu0 0
    %397 = vmatpush1.bf16.msra.mxu0 %v100
    %398 = vmatprep.subr.bf16.mxu0 0
    %399 = vmatpush1.bf16.msra.mxu0 %v101
    %400 = vmatprep.subr.bf16.mxu0 0
    %401 = vmatpush1.bf16.msra.mxu0 0
    %402 = vmatprep.subr.bf16.mxu0 0
    %403 = vmatpush1.bf16.msra.mxu0 0
    %404 = vmatprep.subr.bf16.mxu0 0
    %405 = vmatpush1.bf16.msra.mxu0 0
    %406 = vmatprep.subr.bf16.mxu0 0
    %407 = vmatpush1.bf16.msra.mxu0 0
    %408 = vmatprep.subr.bf16.mxu0 0
    %409 = vmatpush1.bf16.msra.mxu0 0
    %410 = vmatprep.subr.bf16.mxu0 0
    %411 = vmatpush1.bf16.msra.mxu0 0
    %412 = vmatprep.subr.bf16.mxu0 0
    %413 = vmatpush1.bf16.msra.mxu0 0
    %414 = vmatprep.subr.bf16.mxu0 0
    %415 = vmatpush1.bf16.msra.mxu0 0
    %416 = vmatprep.subr.bf16.mxu0 0
    %417 = vmatpush1.bf16.msra.mxu0 0
    %418 = vmatprep.subr.bf16.mxu0 0
    %419 = vmatpush1.bf16.msra.mxu0 0
    %420 = vmatprep.subr.bf16.mxu0 0
    %421 = vmatpush1.bf16.msra.mxu0 0
    %422 = vmatprep.subr.bf16.mxu0 0
    %423 = vmatpush1.bf16.msra.mxu0 0
    %424 = vmatprep.subr.bf16.mxu0 0
    %425 = vmatpush1.bf16.msra.mxu0 0
    %426 = vmatprep.subr.bf16.mxu0 0
    %427 = vmatpush1.bf16.msra.mxu0 0
    %428 = vmatprep.mubr.bf16.mxu0 0
    %429 = vmatmul.mubr.bf16.gmra.mrb[0].mxu0 %v332
    %v430 = vpop.f32.mrb[0].mxu0
    %v431 = vadd.f32 0.0, %v430
    %v432 = vpop.f32.mrb[0].mxu0
    %v433 = vpop.f32.mrb[0].mxu0
    %v434 = vpop.f32.mrb[0].mxu0
    %435 = vdwg.mxu0
    %v437 = vrot.slane %v431, 6
    %v439 = vadd.f32 %v206, %v437
    %v440 = vmul.f32 %v219, %v439
    %v441 = vtanh.pop %v440
    %v442 = vmul.f32 %v219, %v441
    %v443 = vadd.f32 %v442, %v220
    %v445 = vrot.slane %v280, 6
    %v447 = vmul.f32 %v443, %v445
    %449 = vrot.lane.b32.xlu0 %v443, 64
    %v450 = vpop.permute.xlu0 %449
    %v452 = vmul.f32 %v443, %v450
    %454 = vrot.lane.b32.xlu0 %v452, 32
    %v455 = vpop.permute.xlu0 %454
    %v457 = vadd.f32 %v447, %v455
    %v458 = vtanh.pop %v457
    %460 = vrot.lane.b32.xlu0 %v458, 64
    %v461 = vpop.permute.xlu0 %460
    %v463 = vmul.f32 %v443, %v461
    %v464 = vpack.c.bf16 %v463, %v463
    %v465 = vpack.c.bf16 %v395, %v395
    %467 = vrot.lane.b32.xlu0 %v465, 32
    %v468 = vpop.permute.xlu0 %467
    %v470 = vsel %vm221, %v468, 0
    %472 = vmatprep.subr.bf16.mxu0 0
    %473 = vmatpush1.bf16.msra.mxu0 %v112
    %474 = vmatprep.subr.bf16.mxu0 0
    %475 = vmatpush1.bf16.msra.mxu0 %v113
    %476 = vmatprep.subr.bf16.mxu0 0
    %477 = vmatpush1.bf16.msra.mxu0 0
    %478 = vmatprep.subr.bf16.mxu0 0
    %479 = vmatpush1.bf16.msra.mxu0 0
    %480 = vmatprep.subr.bf16.mxu0 0
    %481 = vmatpush1.bf16.msra.mxu0 0
    %482 = vmatprep.subr.bf16.mxu0 0
    %483 = vmatpush1.bf16.msra.mxu0 0
    %484 = vmatprep.subr.bf16.mxu0 0
    %485 = vmatpush1.bf16.msra.mxu0 0
    %486 = vmatprep.subr.bf16.mxu0 0
    %487 = vmatpush1.bf16.msra.mxu0 0
    %488 = vmatprep.subr.bf16.mxu0 0
    %489 = vmatpush1.bf16.msra.mxu0 0
    %490 = vmatprep.subr.bf16.mxu0 0
    %491 = vmatpush1.bf16.msra.mxu0 0
    %492 = vmatprep.subr.bf16.mxu0 0
    %493 = vmatpush1.bf16.msra.mxu0 0
    %494 = vmatprep.subr.bf16.mxu0 0
    %495 = vmatpush1.bf16.msra.mxu0 0
    %496 = vmatprep.subr.bf16.mxu0 0
    %497 = vmatpush1.bf16.msra.mxu0 0
    %498 = vmatprep.subr.bf16.mxu0 0
    %499 = vmatpush1.bf16.msra.mxu0 0
    %500 = vmatprep.subr.bf16.mxu0 0
    %501 = vmatpush1.bf16.msra.mxu0 0
    %502 = vmatprep.subr.bf16.mxu0 0
    %503 = vmatpush1.bf16.msra.mxu0 0
    %504 = vmatprep.mubr.bf16.mxu0 0
    %505 = vmatmul.mubr.bf16.gmra.mrb[0].mxu0 %v470
    %v506 = vpop.f32.mrb[0].mxu0
    %v507 = vadd.f32 0.0, %v506
    %v508 = vpop.f32.mrb[0].mxu0
    %v509 = vpop.f32.mrb[0].mxu0
    %v510 = vpop.f32.mrb[0].mxu0
    %511 = vdwg.mxu0
    %v513 = vrot.slane %v464, 1
    %514 = vrot.lane.b32.xlu0 %v513, 32
    %v515 = vpop.permute.xlu0 %514
    %v517 = vsel %vm221, %v515, 0
    %519 = vmatprep.subr.bf16.mxu0 0
    %520 = vmatpush1.bf16.msra.mxu0 %v106
    %521 = vmatprep.subr.bf16.mxu0 0
    %522 = vmatpush1.bf16.msra.mxu0 %v107
    %523 = vmatprep.subr.bf16.mxu0 0
    %524 = vmatpush1.bf16.msra.mxu0 0
    %525 = vmatprep.subr.bf16.mxu0 0
    %526 = vmatpush1.bf16.msra.mxu0 0
    %527 = vmatprep.subr.bf16.mxu0 0
    %528 = vmatpush1.bf16.msra.mxu0 0
    %529 = vmatprep.subr.bf16.mxu0 0
    %530 = vmatpush1.bf16.msra.mxu0 0
    %531 = vmatprep.subr.bf16.mxu0 0
    %532 = vmatpush1.bf16.msra.mxu0 0
    %533 = vmatprep.subr.bf16.mxu0 0
    %534 = vmatpush1.bf16.msra.mxu0 0
    %535 = vmatprep.subr.bf16.mxu0 0
    %536 = vmatpush1.bf16.msra.mxu0 0
    %537 = vmatprep.subr.bf16.mxu0 0
    %538 = vmatpush1.bf16.msra.mxu0 0
    %539 = vmatprep.subr.bf16.mxu0 0
    %540 = vmatpush1.bf16.msra.mxu0 0
    %541 = vmatprep.subr.bf16.mxu0 0
    %542 = vmatpush1.bf16.msra.mxu0 0
    %543 = vmatprep.subr.bf16.mxu0 0
    %544 = vmatpush1.bf16.msra.mxu0 0
    %545 = vmatprep.subr.bf16.mxu0 0
    %546 = vmatpush1.bf16.msra.mxu0 0
    %547 = vmatprep.subr.bf16.mxu0 0
    %548 = vmatpush1.bf16.msra.mxu0 0
    %549 = vmatprep.subr.bf16.mxu0 0
    %550 = vmatpush1.bf16.msra.mxu0 0
    %551 = vmatprep.mubr.bf16.mxu0 0
    %552 = vmatmul.mubr.bf16.gmra.mrb[0].mxu0 %v517
    %v553 = vpop.f32.mrb[0].mxu0
    %v554 = vadd.f32 %v507, %v553
    %v555 = vpop.f32.mrb[0].mxu0
    %v556 = vpop.f32.mrb[0].mxu0
    %v557 = vpop.f32.mrb[0].mxu0
    %558 = vdwg.mxu0
    %v559 = vadd.f32 %v554, %v119
    %v560 = vmul.f32 %v219, %v559
    %v561 = vtanh.pop %v560
    %v562 = vmul.f32 %v219, %v561
    %v563 = vadd.f32 %v562, %v220
    %v564 = vmul.f32 %v563, %v389
    %566 = vrot.lane.b32.xlu0 %v563, 64
    %v567 = vpop.permute.xlu0 %566
    %v569 = vmul.f32 %v563, %v567
    %571 = vrot.lane.b32.xlu0 %v569, 32
    %v572 = vpop.permute.xlu0 %571
    %v574 = vadd.f32 %v564, %v572
    %v575 = vtanh.pop %v574
    %577 = vrot.lane.b32.xlu0 %v575, 64
    %v578 = vpop.permute.xlu0 %577
    %v580 = vmul.f32 %v563, %v578
    %581 = vmatprep.subr.bf16.mxu0 0
    %582 = vmatpush1.bf16.msra.mxu0 %v100
    %583 = vmatprep.subr.bf16.mxu0 0
    %584 = vmatpush1.bf16.msra.mxu0 %v101
    %585 = vmatprep.subr.bf16.mxu0 0
    %586 = vmatpush1.bf16.msra.mxu0 0
    %587 = vmatprep.subr.bf16.mxu0 0
    %588 = vmatpush1.bf16.msra.mxu0 0
    %589 = vmatprep.subr.bf16.mxu0 0
    %590 = vmatpush1.bf16.msra.mxu0 0
    %591 = vmatprep.subr.bf16.mxu0 0
    %592 = vmatpush1.bf16.msra.mxu0 0
    %593 = vmatprep.subr.bf16.mxu0 0
    %594 = vmatpush1.bf16.msra.mxu0 0
    %595 = vmatprep.subr.bf16.mxu0 0
    %596 = vmatpush1.bf16.msra.mxu0 0
    %597 = vmatprep.subr.bf16.mxu0 0
    %598 = vmatpush1.bf16.msra.mxu0 0
    %599 = vmatprep.subr.bf16.mxu0 0
    %600 = vmatpush1.bf16.msra.mxu0 0
    %601 = vmatprep.subr.bf16.mxu0 0
    %602 = vmatpush1.bf16.msra.mxu0 0
    %603 = vmatprep.subr.bf16.mxu0 0
    %604 = vmatpush1.bf16.msra.mxu0 0
    %605 = vmatprep.subr.bf16.mxu0 0
    %606 = vmatpush1.bf16.msra.mxu0 0
    %607 = vmatprep.subr.bf16.mxu0 0
    %608 = vmatpush1.bf16.msra.mxu0 0
    %609 = vmatprep.subr.bf16.mxu0 0
    %610 = vmatpush1.bf16.msra.mxu0 0
    %611 = vmatprep.subr.bf16.mxu0 0
    %612 = vmatpush1.bf16.msra.mxu0 0
    %613 = vmatprep.mubr.bf16.mxu0 0
    %614 = vmatmul.mubr.bf16.gmra.mrb[0].mxu0 %v517
    %v615 = vpop.f32.mrb[0].mxu0
    %v616 = vadd.f32 0.0, %v615
    %v617 = vpop.f32.mrb[0].mxu0
    %v618 = vpop.f32.mrb[0].mxu0
    %v619 = vpop.f32.mrb[0].mxu0
    %620 = vdwg.mxu0
    %v622 = vrot.slane %v616, 4
    %v624 = vadd.f32 %v206, %v622
    %v625 = vmul.f32 %v219, %v624
    %v626 = vtanh.pop %v625
    %v627 = vmul.f32 %v219, %v626
    %v628 = vadd.f32 %v627, %v220
    %v630 = vrot.slane %v457, 6
    %v632 = vmul.f32 %v628, %v630
    %634 = vrot.lane.b32.xlu0 %v628, 64
    %v635 = vpop.permute.xlu0 %634
    %v637 = vmul.f32 %v628, %v635
    %639 = vrot.lane.b32.xlu0 %v637, 32
    %v640 = vpop.permute.xlu0 %639
    %v642 = vadd.f32 %v632, %v640
    %v643 = vtanh.pop %v642
    %645 = vrot.lane.b32.xlu0 %v643, 64
    %v646 = vpop.permute.xlu0 %645
    %v648 = vmul.f32 %v628, %v646
    %v649 = vpack.c.bf16 %v648, %v648
    %v650 = vpack.c.bf16 %v580, %v580
    %652 = vrot.lane.b32.xlu0 %v650, 32
    %v653 = vpop.permute.xlu0 %652
    %v655 = vsel %vm221, %v653, 0
    %657 = vmatprep.subr.bf16.mxu0 0
    %658 = vmatpush1.bf16.msra.mxu0 %v112
    %659 = vmatprep.subr.bf16.mxu0 0
    %660 = vmatpush1.bf16.msra.mxu0 %v113
    %661 = vmatprep.subr.bf16.mxu0 0
    %662 = vmatpush1.bf16.msra.mxu0 0
    %663 = vmatprep.subr.bf16.mxu0 0
    %664 = vmatpush1.bf16.msra.mxu0 0
    %665 = vmatprep.subr.bf16.mxu0 0
    %666 = vmatpush1.bf16.msra.mxu0 0
    %667 = vmatprep.subr.bf16.mxu0 0
    %668 = vmatpush1.bf16.msra.mxu0 0
    %669 = vmatprep.subr.bf16.mxu0 0
    %670 = vmatpush1.bf16.msra.mxu0 0
    %671 = vmatprep.subr.bf16.mxu0 0
    %672 = vmatpush1.bf16.msra.mxu0 0
    %673 = vmatprep.subr.bf16.mxu0 0
    %674 = vmatpush1.bf16.msra.mxu0 0
    %675 = vmatprep.subr.bf16.mxu0 0
    %676 = vmatpush1.bf16.msra.mxu0 0
    %677 = vmatprep.subr.bf16.mxu0 0
    %678 = vmatpush1.bf16.msra.mxu0 0
    %679 = vmatprep.subr.bf16.mxu0 0
    %680 = vmatpush1.bf16.msra.mxu0 0
    %681 = vmatprep.subr.bf16.mxu0 0
    %682 = vmatpush1.bf16.msra.mxu0 0
    %683 = vmatprep.subr.bf16.mxu0 0
    %684 = vmatpush1.bf16.msra.mxu0 0
    %685 = vmatprep.subr.bf16.mxu0 0
    %686 = vmatpush1.bf16.msra.mxu0 0
    %687 = vmatprep.subr.bf16.mxu0 0
    %688 = vmatpush1.bf16.msra.mxu0 0
    %689 = vmatprep.mubr.bf16.mxu0 0
    %690 = vmatmul.mubr.bf16.gmra.mrb[0].mxu0 %v655
    %v691 = vpop.f32.mrb[0].mxu0
    %v692 = vadd.f32 0.0, %v691
    %v693 = vpop.f32.mrb[0].mxu0
    %v694 = vpop.f32.mrb[0].mxu0
    %v695 = vpop.f32.mrb[0].mxu0
    %696 = vdwg.mxu0
    %v698 = vrot.slane %v649, 2
    %699 = vrot.lane.b32.xlu0 %v698, 32
    %v700 = vpop.permute.xlu0 %699
    %v702 = vsel %vm221, %v700, 0
    %704 = vmatprep.subr.bf16.mxu0 0
    %705 = vmatpush1.bf16.msra.mxu0 %v106
    %706 = vmatprep.subr.bf16.mxu0 0
    %707 = vmatpush1.bf16.msra.mxu0 %v107
    %708 = vmatprep.subr.bf16.mxu0 0
    %709 = vmatpush1.bf16.msra.mxu0 0
    %710 = vmatprep.subr.bf16.mxu0 0
    %711 = vmatpush1.bf16.msra.mxu0 0
    %712 = vmatprep.subr.bf16.mxu0 0
    %713 = vmatpush1.bf16.msra.mxu0 0
    %714 = vmatprep.subr.bf16.mxu0 0
    %715 = vmatpush1.bf16.msra.mxu0 0
    %716 = vmatprep.subr.bf16.mxu0 0
    %717 = vmatpush1.bf16.msra.mxu0 0
    %718 = vmatprep.subr.bf16.mxu0 0
    %719 = vmatpush1.bf16.msra.mxu0 0
    %720 = vmatprep.subr.bf16.mxu0 0
    %721 = vmatpush1.bf16.msra.mxu0 0
    %722 = vmatprep.subr.bf16.mxu0 0
    %723 = vmatpush1.bf16.msra.mxu0 0
    %724 = vmatprep.subr.bf16.mxu0 0
    %725 = vmatpush1.bf16.msra.mxu0 0
    %726 = vmatprep.subr.bf16.mxu0 0
    %727 = vmatpush1.bf16.msra.mxu0 0
    %728 = vmatprep.subr.bf16.mxu0 0
    %729 = vmatpush1.bf16.msra.mxu0 0
    %730 = vmatprep.subr.bf16.mxu0 0
    %731 = vmatpush1.bf16.msra.mxu0 0
    %732 = vmatprep.subr.bf16.mxu0 0
    %733 = vmatpush1.bf16.msra.mxu0 0
    %734 = vmatprep.subr.bf16.mxu0 0
    %735 = vmatpush1.bf16.msra.mxu0 0
    %736 = vmatprep.mubr.bf16.mxu0 0
    %737 = vmatmul.mubr.bf16.gmra.mrb[0].mxu0 %v702
    %v738 = vpop.f32.mrb[0].mxu0
    %v739 = vadd.f32 %v692, %v738
    %v740 = vpop.f32.mrb[0].mxu0
    %v741 = vpop.f32.mrb[0].mxu0
    %v742 = vpop.f32.mrb[0].mxu0
    %743 = vdwg.mxu0
    %v744 = vadd.f32 %v739, %v119
    %v745 = vmul.f32 %v219, %v744
    %v746 = vtanh.pop %v745
    %v747 = vmul.f32 %v219, %v746
    %v748 = vadd.f32 %v747, %v220
    %v749 = vmul.f32 %v748, %v574
    %751 = vrot.lane.b32.xlu0 %v748, 64
    %v752 = vpop.permute.xlu0 %751
    %v754 = vmul.f32 %v748, %v752
    %756 = vrot.lane.b32.xlu0 %v754, 32
    %v757 = vpop.permute.xlu0 %756
    %v759 = vadd.f32 %v749, %v757
    %v760 = vtanh.pop %v759
    %762 = vrot.lane.b32.xlu0 %v760, 64
    %v763 = vpop.permute.xlu0 %762
    %v765 = vmul.f32 %v748, %v763
    %766 = vmatprep.subr.bf16.mxu0 0
    %767 = vmatpush1.bf16.msra.mxu0 %v100
    %768 = vmatprep.subr.bf16.mxu0 0
    %769 = vmatpush1.bf16.msra.mxu0 %v101
    %770 = vmatprep.subr.bf16.mxu0 0
    %771 = vmatpush1.bf16.msra.mxu0 0
    %772 = vmatprep.subr.bf16.mxu0 0
    %773 = vmatpush1.bf16.msra.mxu0 0
    %774 = vmatprep.subr.bf16.mxu0 0
    %775 = vmatpush1.bf16.msra.mxu0 0
    %776 = vmatprep.subr.bf16.mxu0 0
    %777 = vmatpush1.bf16.msra.mxu0 0
    %778 = vmatprep.subr.bf16.mxu0 0
    %779 = vmatpush1.bf16.msra.mxu0 0
    %780 = vmatprep.subr.bf16.mxu0 0
    %781 = vmatpush1.bf16.msra.mxu0 0
    %782 = vmatprep.subr.bf16.mxu0 0
    %783 = vmatpush1.bf16.msra.mxu0 0
    %784 = vmatprep.subr.bf16.mxu0 0
    %785 = vmatpush1.bf16.msra.mxu0 0
    %786 = vmatprep.subr.bf16.mxu0 0
    %787 = vmatpush1.bf16.msra.mxu0 0
    %788 = vmatprep.subr.bf16.mxu0 0
    %789 = vmatpush1.bf16.msra.mxu0 0
    %790 = vmatprep.subr.bf16.mxu0 0
    %791 = vmatpush1.bf16.msra.mxu0 0
    %792 = vmatprep.subr.bf16.mxu0 0
    %793 = vmatpush1.bf16.msra.mxu0 0
    %794 = vmatprep.subr.bf16.mxu0 0
    %795 = vmatpush1.bf16.msra.mxu0 0
    %796 = vmatprep.subr.bf16.mxu0 0
    %797 = vmatpush1.bf16.msra.mxu0 0
    %798 = vmatprep.mubr.bf16.mxu0 0
    %799 = vmatmul.mubr.bf16.gmra.mrb[0].mxu0 %v702
    %v800 = vpop.f32.mrb[0].mxu0
    %v801 = vadd.f32 0.0, %v800
    %v802 = vpop.f32.mrb[0].mxu0
    %v803 = vpop.f32.mrb[0].mxu0
    %v804 = vpop.f32.mrb[0].mxu0
    %805 = vdwg.mxu0
    %v807 = vrot.slane %v801, 2
    %v809 = vadd.f32 %v206, %v807
    %v810 = vmul.f32 %v219, %v809
    %v811 = vtanh.pop %v810
    %v812 = vmul.f32 %v219, %v811
    %v813 = vadd.f32 %v812, %v220
    %v815 = vrot.slane %v642, 6
    %v817 = vmul.f32 %v813, %v815
    %819 = vrot.lane.b32.xlu0 %v813, 64
    %v820 = vpop.permute.xlu0 %819
    %v822 = vmul.f32 %v813, %v820
    %824 = vrot.lane.b32.xlu0 %v822, 32
    %v825 = vpop.permute.xlu0 %824
    %v827 = vadd.f32 %v817, %v825
    %v828 = vtanh.pop %v827
    %830 = vrot.lane.b32.xlu0 %v828, 64
    %v831 = vpop.permute.xlu0 %830
    %v833 = vmul.f32 %v813, %v831
    %v834 = vpack.c.bf16 %v833, %v833
    %v835 = vpack.c.bf16 %v765, %v765
    %837 = vrot.lane.b32.xlu0 %v835, 32
    %v838 = vpop.permute.xlu0 %837
    %v840 = vsel %vm221, %v838, 0
    %842 = vmatprep.subr.bf16.mxu0 0
    %843 = vmatpush1.bf16.msra.mxu0 %v112
    %844 = vmatprep.subr.bf16.mxu0 0
    %845 = vmatpush1.bf16.msra.mxu0 %v113
    %846 = vmatprep.subr.bf16.mxu0 0
    %847 = vmatpush1.bf16.msra.mxu0 0
    %848 = vmatprep.subr.bf16.mxu0 0
    %849 = vmatpush1.bf16.msra.mxu0 0
    %850 = vmatprep.subr.bf16.mxu0 0
    %851 = vmatpush1.bf16.msra.mxu0 0
    %852 = vmatprep.subr.bf16.mxu0 0
    %853 = vmatpush1.bf16.msra.mxu0 0
    %854 = vmatprep.subr.bf16.mxu0 0
    %855 = vmatpush1.bf16.msra.mxu0 0
    %856 = vmatprep.subr.bf16.mxu0 0
    %857 = vmatpush1.bf16.msra.mxu0 0
    %858 = vmatprep.subr.bf16.mxu0 0
    %859 = vmatpush1.bf16.msra.mxu0 0
    %860 = vmatprep.subr.bf16.mxu0 0
    %861 = vmatpush1.bf16.msra.mxu0 0
    %862 = vmatprep.subr.bf16.mxu0 0
    %863 = vmatpush1.bf16.msra.mxu0 0
    %864 = vmatprep.subr.bf16.mxu0 0
    %865 = vmatpush1.bf16.msra.mxu0 0
    %866 = vmatprep.subr.bf16.mxu0 0
    %867 = vmatpush1.bf16.msra.mxu0 0
    %868 = vmatprep.subr.bf16.mxu0 0
    %869 = vmatpush1.bf16.msra.mxu0 0
    %870 = vmatprep.subr.bf16.mxu0 0
    %871 = vmatpush1.bf16.msra.mxu0 0
    %872 = vmatprep.subr.bf16.mxu0 0
    %873 = vmatpush1.bf16.msra.mxu0 0
    %874 = vmatprep.mubr.bf16.mxu0 0
    %875 = vmatmul.mubr.bf16.gmra.mrb[0].mxu0 %v840
    %v876 = vpop.f32.mrb[0].mxu0
    %v877 = vadd.f32 0.0, %v876
    %v878 = vpop.f32.mrb[0].mxu0
    %v879 = vpop.f32.mrb[0].mxu0
    %v880 = vpop.f32.mrb[0].mxu0
    %881 = vdwg.mxu0
    %v883 = vrot.slane %v834, 3
    %884 = vrot.lane.b32.xlu0 %v883, 32
    %v885 = vpop.permute.xlu0 %884
    %v887 = vsel %vm221, %v885, 0
    %889 = vmatprep.subr.bf16.mxu0 0
    %890 = vmatpush1.bf16.msra.mxu0 %v106
    %891 = vmatprep.subr.bf16.mxu0 0
    %892 = vmatpush1.bf16.msra.mxu0 %v107
    %893 = vmatprep.subr.bf16.mxu0 0
    %894 = vmatpush1.bf16.msra.mxu0 0
    %895 = vmatprep.subr.bf16.mxu0 0
    %896 = vmatpush1.bf16.msra.mxu0 0
    %897 = vmatprep.subr.bf16.mxu0 0
    %898 = vmatpush1.bf16.msra.mxu0 0
    %899 = vmatprep.subr.bf16.mxu0 0
    %900 = vmatpush1.bf16.msra.mxu0 0
    %901 = vmatprep.subr.bf16.mxu0 0
    %902 = vmatpush1.bf16.msra.mxu0 0
    %903 = vmatprep.subr.bf16.mxu0 0
    %904 = vmatpush1.bf16.msra.mxu0 0
    %905 = vmatprep.subr.bf16.mxu0 0
    %906 = vmatpush1.bf16.msra.mxu0 0
    %907 = vmatprep.subr.bf16.mxu0 0
    %908 = vmatpush1.bf16.msra.mxu0 0
    %909 = vmatprep.subr.bf16.mxu0 0
    %910 = vmatpush1.bf16.msra.mxu0 0
    %911 = vmatprep.subr.bf16.mxu0 0
    %912 = vmatpush1.bf16.msra.mxu0 0
    %913 = vmatprep.subr.bf16.mxu0 0
    %914 = vmatpush1.bf16.msra.mxu0 0
    %915 = vmatprep.subr.bf16.mxu0 0
    %916 = vmatpush1.bf16.msra.mxu0 0
    %917 = vmatprep.subr.bf16.mxu0 0
    %918 = vmatpush1.bf16.msra.mxu0 0
    %919 = vmatprep.subr.bf16.mxu0 0
    %920 = vmatpush1.bf16.msra.mxu0 0
    %921 = vmatprep.mubr.bf16.mxu0 0
    %922 = vmatmul.mubr.bf16.gmra.mrb[0].mxu0 %v887
    %v923 = vpop.f32.mrb[0].mxu0
    %v924 = vadd.f32 %v877, %v923
    %v925 = vpop.f32.mrb[0].mxu0
    %v926 = vpop.f32.mrb[0].mxu0
    %v927 = vpop.f32.mrb[0].mxu0
    %928 = vdwg.mxu0
    %v929 = vadd.f32 %v924, %v119
    %v930 = vmul.f32 %v219, %v929
    %v931 = vtanh.pop %v930
    %v932 = vmul.f32 %v219, %v931
    %v933 = vadd.f32 %v932, %v220
    %v934 = vmul.f32 %v933, %v759
    %936 = vrot.lane.b32.xlu0 %v933, 64
    %v937 = vpop.permute.xlu0 %936
    %v939 = vmul.f32 %v933, %v937
    %941 = vrot.lane.b32.xlu0 %v939, 32
    %v942 = vpop.permute.xlu0 %941
    %v944 = vadd.f32 %v934, %v942
    %v945 = vtanh.pop %v944
    %947 = vrot.lane.b32.xlu0 %v945, 64
    %v948 = vpop.permute.xlu0 %947
    %v950 = vmul.f32 %v933, %v948
    %951 = vmatprep.subr.bf16.mxu0 0
    %952 = vmatpush1.bf16.msra.mxu0 %v100
    %953 = vmatprep.subr.bf16.mxu0 0
    %954 = vmatpush1.bf16.msra.mxu0 %v101
    %955 = vmatprep.subr.bf16.mxu0 0
    %956 = vmatpush1.bf16.msra.mxu0 0
    %957 = vmatprep.subr.bf16.mxu0 0
    %958 = vmatpush1.bf16.msra.mxu0 0
    %959 = vmatprep.subr.bf16.mxu0 0
    %960 = vmatpush1.bf16.msra.mxu0 0
    %961 = vmatprep.subr.bf16.mxu0 0
    %962 = vmatpush1.bf16.msra.mxu0 0
    %963 = vmatprep.subr.bf16.mxu0 0
    %964 = vmatpush1.bf16.msra.mxu0 0
    %965 = vmatprep.subr.bf16.mxu0 0
    %966 = vmatpush1.bf16.msra.mxu0 0
    %967 = vmatprep.subr.bf16.mxu0 0
    %968 = vmatpush1.bf16.msra.mxu0 0
    %969 = vmatprep.subr.bf16.mxu0 0
    %970 = vmatpush1.bf16.msra.mxu0 0
    %971 = vmatprep.subr.bf16.mxu0 0
    %972 = vmatpush1.bf16.msra.mxu0 0
    %973 = vmatprep.subr.bf16.mxu0 0
    %974 = vmatpush1.bf16.msra.mxu0 0
    %975 = vmatprep.subr.bf16.mxu0 0
    %976 = vmatpush1.bf16.msra.mxu0 0
    %977 = vmatprep.subr.bf16.mxu0 0
    %978 = vmatpush1.bf16.msra.mxu0 0
    %979 = vmatprep.subr.bf16.mxu0 0
    %980 = vmatpush1.bf16.msra.mxu0 0
    %981 = vmatprep.subr.bf16.mxu0 0
    %982 = vmatpush1.bf16.msra.mxu0 0
    %983 = vmatprep.mubr.bf16.mxu0 0
    %984 = vmatmul.mubr.bf16.gmra.mrb[0].mxu0 %v887
    %v985 = vpop.f32.mrb[0].mxu0
    %v986 = vadd.f32 0.0, %v985
    %v987 = vpop.f32.mrb[0].mxu0
    %v988 = vpop.f32.mrb[0].mxu0
    %v989 = vpop.f32.mrb[0].mxu0
    %990 = vdwg.mxu0
    %v991 = vadd.f32 %v211, %v986
    %v992 = vmul.f32 %v219, %v991
    %v993 = vtanh.pop %v992
    %v994 = vmul.f32 %v219, %v993
    %v995 = vadd.f32 %v994, %v220
    %v997 = vrot.slane %v827, 6
    %v999 = vmul.f32 %v995, %v997
    %1001 = vrot.lane.b32.xlu0 %v995, 64
    %v1002 = vpop.permute.xlu0 %1001
    %v1004 = vmul.f32 %v995, %v1002
    %1006 = vrot.lane.b32.xlu0 %v1004, 32
    %v1007 = vpop.permute.xlu0 %1006
    %v1009 = vadd.f32 %v999, %v1007
    %v1010 = vtanh.pop %v1009
    %1012 = vrot.lane.b32.xlu0 %v1010, 64
    %v1013 = vpop.permute.xlu0 %1012
    %v1015 = vmul.f32 %v995, %v1013
    %v1016 = vpack.c.bf16 %v1015, %v1015
    %v1017 = vpack.c.bf16 %v950, %v950
    %1019 = vrot.lane.b32.xlu0 %v1017, 32
    %v1020 = vpop.permute.xlu0 %1019
    %v1022 = vsel %vm221, %v1020, 0
    %1024 = vmatprep.subr.bf16.mxu0 0
    %1025 = vmatpush1.bf16.msra.mxu0 %v112
    %1026 = vmatprep.subr.bf16.mxu0 0
    %1027 = vmatpush1.bf16.msra.mxu0 %v113
    %1028 = vmatprep.subr.bf16.mxu0 0
    %1029 = vmatpush1.bf16.msra.mxu0 0
    %1030 = vmatprep.subr.bf16.mxu0 0
    %1031 = vmatpush1.bf16.msra.mxu0 0
    %1032 = vmatprep.subr.bf16.mxu0 0
    %1033 = vmatpush1.bf16.msra.mxu0 0
    %1034 = vmatprep.subr.bf16.mxu0 0
    %1035 = vmatpush1.bf16.msra.mxu0 0
    %1036 = vmatprep.subr.bf16.mxu0 0
    %1037 = vmatpush1.bf16.msra.mxu0 0
    %1038 = vmatprep.subr.bf16.mxu0 0
    %1039 = vmatpush1.bf16.msra.mxu0 0
    %1040 = vmatprep.subr.bf16.mxu0 0
    %1041 = vmatpush1.bf16.msra.mxu0 0
    %1042 = vmatprep.subr.bf16.mxu0 0
    %1043 = vmatpush1.bf16.msra.mxu0 0
    %1044 = vmatprep.subr.bf16.mxu0 0
    %1045 = vmatpush1.bf16.msra.mxu0 0
    %1046 = vmatprep.subr.bf16.mxu0 0
    %1047 = vmatpush1.bf16.msra.mxu0 0
    %1048 = vmatprep.subr.bf16.mxu0 0
    %1049 = vmatpush1.bf16.msra.mxu0 0
    %1050 = vmatprep.subr.bf16.mxu0 0
    %1051 = vmatpush1.bf16.msra.mxu0 0
    %1052 = vmatprep.subr.bf16.mxu0 0
    %1053 = vmatpush1.bf16.msra.mxu0 0
    %1054 = vmatprep.subr.bf16.mxu0 0
    %1055 = vmatpush1.bf16.msra.mxu0 0
    %1056 = vmatprep.mubr.bf16.mxu0 0
    %1057 = vmatmul.mubr.bf16.gmra.mrb[0].mxu0 %v1022
    %v1058 = vpop.f32.mrb[0].mxu0
    %v1059 = vadd.f32 0.0, %v1058
    %v1060 = vpop.f32.mrb[0].mxu0
    %v1061 = vpop.f32.mrb[0].mxu0
    %v1062 = vpop.f32.mrb[0].mxu0
    %1063 = vdwg.mxu0
    %1065 = vrot.lane.b32.xlu0 %v1016, 32
    %v1066 = vpop.permute.xlu0 %1065
    %v1068 = vsel %vm221, %v1066, 0
    %1070 = vmatprep.subr.bf16.mxu0 0
    %1071 = vmatpush1.bf16.msra.mxu0 %v106
    %1072 = vmatprep.subr.bf16.mxu0 0
    %1073 = vmatpush1.bf16.msra.mxu0 %v107
    %1074 = vmatprep.subr.bf16.mxu0 0
    %1075 = vmatpush1.bf16.msra.mxu0 0
    %1076 = vmatprep.subr.bf16.mxu0 0
    %1077 = vmatpush1.bf16.msra.mxu0 0
    %1078 = vmatprep.subr.bf16.mxu0 0
    %1079 = vmatpush1.bf16.msra.mxu0 0
    %1080 = vmatprep.subr.bf16.mxu0 0
    %1081 = vmatpush1.bf16.msra.mxu0 0
    %1082 = vmatprep.subr.bf16.mxu0 0
    %1083 = vmatpush1.bf16.msra.mxu0 0
    %1084 = vmatprep.subr.bf16.mxu0 0
    %1085 = vmatpush1.bf16.msra.mxu0 0
    %1086 = vmatprep.subr.bf16.mxu0 0
    %1087 = vmatpush1.bf16.msra.mxu0 0
    %1088 = vmatprep.subr.bf16.mxu0 0
    %1089 = vmatpush1.bf16.msra.mxu0 0
    %1090 = vmatprep.subr.bf16.mxu0 0
    %1091 = vmatpush1.bf16.msra.mxu0 0
    %1092 = vmatprep.subr.bf16.mxu0 0
    %1093 = vmatpush1.bf16.msra.mxu0 0
    %1094 = vmatprep.subr.bf16.mxu0 0
    %1095 = vmatpush1.bf16.msra.mxu0 0
    %1096 = vmatprep.subr.bf16.mxu0 0
    %1097 = vmatpush1.bf16.msra.mxu0 0
    %1098 = vmatprep.subr.bf16.mxu0 0
    %1099 = vmatpush1.bf16.msra.mxu0 0
    %1100 = vmatprep.subr.bf16.mxu0 0
    %1101 = vmatpush1.bf16.msra.mxu0 0
    %1102 = vmatprep.mubr.bf16.mxu0 0
    %1103 = vmatmul.mubr.bf16.gmra.mrb[0].mxu0 %v1068
    %v1104 = vpop.f32.mrb[0].mxu0
    %v1105 = vadd.f32 %v1059, %v1104
    %v1106 = vpop.f32.mrb[0].mxu0
    %v1107 = vpop.f32.mrb[0].mxu0
    %v1108 = vpop.f32.mrb[0].mxu0
    %1109 = vdwg.mxu0
    %v1110 = vadd.f32 %v1105, %v119
    %v1111 = vmul.f32 %v219, %v1110
    %v1112 = vtanh.pop %v1111
    %v1113 = vmul.f32 %v219, %v1112
    %v1114 = vadd.f32 %v1113, %v220
    %v1115 = vmul.f32 %v1114, %v944
    %1117 = vrot.lane.b32.xlu0 %v1114, 64
    %v1118 = vpop.permute.xlu0 %1117
    %v1120 = vmul.f32 %v1114, %v1118
    %1122 = vrot.lane.b32.xlu0 %v1120, 32
    %v1123 = vpop.permute.xlu0 %1122
    %v1125 = vadd.f32 %v1115, %v1123
    %v1126 = vtanh.pop %v1125
    %1128 = vrot.lane.b32.xlu0 %v1126, 64
    %v1129 = vpop.permute.xlu0 %1128
    %v1131 = vmul.f32 %v1114, %v1129
    %1132 = vmatprep.subr.bf16.mxu0 0
    %1133 = vmatpush1.bf16.msra.mxu0 %v100
    %1134 = vmatprep.subr.bf16.mxu0 0
    %1135 = vmatpush1.bf16.msra.mxu0 %v101
    %1136 = vmatprep.subr.bf16.mxu0 0
    %1137 = vmatpush1.bf16.msra.mxu0 0
    %1138 = vmatprep.subr.bf16.mxu0 0
    %1139 = vmatpush1.bf16.msra.mxu0 0
    %1140 = vmatprep.subr.bf16.mxu0 0
    %1141 = vmatpush1.bf16.msra.mxu0 0
    %1142 = vmatprep.subr.bf16.mxu0 0
    %1143 = vmatpush1.bf16.msra.mxu0 0
    %1144 = vmatprep.subr.bf16.mxu0 0
    %1145 = vmatpush1.bf16.msra.mxu0 0
    %1146 = vmatprep.subr.bf16.mxu0 0
    %1147 = vmatpush1.bf16.msra.mxu0 0
    %1148 = vmatprep.subr.bf16.mxu0 0
    %1149 = vmatpush1.bf16.msra.mxu0 0
    %1150 = vmatprep.subr.bf16.mxu0 0
    %1151 = vmatpush1.bf16.msra.mxu0 0
    %1152 = vmatprep.subr.bf16.mxu0 0
    %1153 = vmatpush1.bf16.msra.mxu0 0
    %1154 = vmatprep.subr.bf16.mxu0 0
    %1155 = vmatpush1.bf16.msra.mxu0 0
    %1156 = vmatprep.subr.bf16.mxu0 0
    %1157 = vmatpush1.bf16.msra.mxu0 0
    %1158 = vmatprep.subr.bf16.mxu0 0
    %1159 = vmatpush1.bf16.msra.mxu0 0
    %1160 = vmatprep.subr.bf16.mxu0 0
    %1161 = vmatpush1.bf16.msra.mxu0 0
    %1162 = vmatprep.subr.bf16.mxu0 0
    %1163 = vmatpush1.bf16.msra.mxu0 0
    %1164 = vmatprep.mubr.bf16.mxu0 0
    %1165 = vmatmul.mubr.bf16.gmra.mrb[0].mxu0 %v1068
    %v1166 = vpop.f32.mrb[0].mxu0
    %v1167 = vadd.f32 0.0, %v1166
    %v1168 = vpop.f32.mrb[0].mxu0
    %v1169 = vpop.f32.mrb[0].mxu0
    %v1170 = vpop.f32.mrb[0].mxu0
    %1171 = vdwg.mxu0
    %v1173 = vrot.slane %v1167, 6
    %v1175 = vadd.f32 %v211, %v1173
    %v1176 = vmul.f32 %v219, %v1175
    %v1177 = vtanh.pop %v1176
    %v1178 = vmul.f32 %v219, %v1177
    %v1179 = vadd.f32 %v1178, %v220
    %v1181 = vrot.slane %v1009, 6
    %v1183 = vmul.f32 %v1179, %v1181
    %1185 = vrot.lane.b32.xlu0 %v1179, 64
    %v1186 = vpop.permute.xlu0 %1185
    %v1188 = vmul.f32 %v1179, %v1186
    %1190 = vrot.lane.b32.xlu0 %v1188, 32
    %v1191 = vpop.permute.xlu0 %1190
    %v1193 = vadd.f32 %v1183, %v1191
    %v1194 = vtanh.pop %v1193
    %1196 = vrot.lane.b32.xlu0 %v1194, 64
    %v1197 = vpop.permute.xlu0 %1196
    %v1199 = vmul.f32 %v1179, %v1197
    %v1200 = vpack.c.bf16 %v1199, %v1199
    %v1201 = vpack.c.bf16 %v1131, %v1131
    %1203 = vrot.lane.b32.xlu0 %v1201, 32
    %v1204 = vpop.permute.xlu0 %1203
    %v1206 = vsel %vm221, %v1204, 0
    %1208 = vmatprep.subr.bf16.mxu0 0
    %1209 = vmatpush1.bf16.msra.mxu0 %v112
    %1210 = vmatprep.subr.bf16.mxu0 0
    %1211 = vmatpush1.bf16.msra.mxu0 %v113
    %1212 = vmatprep.subr.bf16.mxu0 0
    %1213 = vmatpush1.bf16.msra.mxu0 0
    %1214 = vmatprep.subr.bf16.mxu0 0
    %1215 = vmatpush1.bf16.msra.mxu0 0
    %1216 = vmatprep.subr.bf16.mxu0 0
    %1217 = vmatpush1.bf16.msra.mxu0 0
    %1218 = vmatprep.subr.bf16.mxu0 0
    %1219 = vmatpush1.bf16.msra.mxu0 0
    %1220 = vmatprep.subr.bf16.mxu0 0
    %1221 = vmatpush1.bf16.msra.mxu0 0
    %1222 = vmatprep.subr.bf16.mxu0 0
    %1223 = vmatpush1.bf16.msra.mxu0 0
    %1224 = vmatprep.subr.bf16.mxu0 0
    %1225 = vmatpush1.bf16.msra.mxu0 0
    %1226 = vmatprep.subr.bf16.mxu0 0
    %1227 = vmatpush1.bf16.msra.mxu0 0
    %1228 = vmatprep.subr.bf16.mxu0 0
    %1229 = vmatpush1.bf16.msra.mxu0 0
    %1230 = vmatprep.subr.bf16.mxu0 0
    %1231 = vmatpush1.bf16.msra.mxu0 0
    %1232 = vmatprep.subr.bf16.mxu0 0
    %1233 = vmatpush1.bf16.msra.mxu0 0
    %1234 = vmatprep.subr.bf16.mxu0 0
    %1235 = vmatpush1.bf16.msra.mxu0 0
    %1236 = vmatprep.subr.bf16.mxu0 0
    %1237 = vmatpush1.bf16.msra.mxu0 0
    %1238 = vmatprep.subr.bf16.mxu0 0
    %1239 = vmatpush1.bf16.msra.mxu0 0
    %1240 = vmatprep.mubr.bf16.mxu0 0
    %1241 = vmatmul.mubr.bf16.gmra.mrb[0].mxu0 %v1206
    %v1242 = vpop.f32.mrb[0].mxu0
    %v1243 = vadd.f32 0.0, %v1242
    %v1244 = vpop.f32.mrb[0].mxu0
    %v1245 = vpop.f32.mrb[0].mxu0
    %v1246 = vpop.f32.mrb[0].mxu0
    %1247 = vdwg.mxu0
    %v1249 = vrot.slane %v1200, 1
    %1250 = vrot.lane.b32.xlu0 %v1249, 32
    %v1251 = vpop.permute.xlu0 %1250
    %v1253 = vsel %vm221, %v1251, 0
    %1255 = vmatprep.subr.bf16.mxu0 0
    %1256 = vmatpush1.bf16.msra.mxu0 %v106
    %1257 = vmatprep.subr.bf16.mxu0 0
    %1258 = vmatpush1.bf16.msra.mxu0 %v107
    %1259 = vmatprep.subr.bf16.mxu0 0
    %1260 = vmatpush1.bf16.msra.mxu0 0
    %1261 = vmatprep.subr.bf16.mxu0 0
    %1262 = vmatpush1.bf16.msra.mxu0 0
    %1263 = vmatprep.subr.bf16.mxu0 0
    %1264 = vmatpush1.bf16.msra.mxu0 0
    %1265 = vmatprep.subr.bf16.mxu0 0
    %1266 = vmatpush1.bf16.msra.mxu0 0
    %1267 = vmatprep.subr.bf16.mxu0 0
    %1268 = vmatpush1.bf16.msra.mxu0 0
    %1269 = vmatprep.subr.bf16.mxu0 0
    %1270 = vmatpush1.bf16.msra.mxu0 0
    %1271 = vmatprep.subr.bf16.mxu0 0
    %1272 = vmatpush1.bf16.msra.mxu0 0
    %1273 = vmatprep.subr.bf16.mxu0 0
    %1274 = vmatpush1.bf16.msra.mxu0 0
    %1275 = vmatprep.subr.bf16.mxu0 0
    %1276 = vmatpush1.bf16.msra.mxu0 0
    %1277 = vmatprep.subr.bf16.mxu0 0
    %1278 = vmatpush1.bf16.msra.mxu0 0
    %1279 = vmatprep.subr.bf16.mxu0 0
    %1280 = vmatpush1.bf16.msra.mxu0 0
    %1281 = vmatprep.subr.bf16.mxu0 0
    %1282 = vmatpush1.bf16.msra.mxu0 0
    %1283 = vmatprep.subr.bf16.mxu0 0
    %1284 = vmatpush1.bf16.msra.mxu0 0
    %1285 = vmatprep.subr.bf16.mxu0 0
    %1286 = vmatpush1.bf16.msra.mxu0 0
    %1287 = vmatprep.mubr.bf16.mxu0 0
    %1288 = vmatmul.mubr.bf16.gmra.mrb[0].mxu0 %v1253
    %v1289 = vpop.f32.mrb[0].mxu0
    %v1290 = vadd.f32 %v1243, %v1289
    %v1291 = vpop.f32.mrb[0].mxu0
    %v1292 = vpop.f32.mrb[0].mxu0
    %v1293 = vpop.f32.mrb[0].mxu0
    %1294 = vdwg.mxu0
    %v1295 = vadd.f32 %v1290, %v119
    %v1296 = vmul.f32 %v219, %v1295
    %v1297 = vtanh.pop %v1296
    %v1298 = vmul.f32 %v219, %v1297
    %v1299 = vadd.f32 %v1298, %v220
    %v1300 = vmul.f32 %v1299, %v1125
    %1302 = vrot.lane.b32.xlu0 %v1299, 64
    %v1303 = vpop.permute.xlu0 %1302
    %v1305 = vmul.f32 %v1299, %v1303
    %1307 = vrot.lane.b32.xlu0 %v1305, 32
    %v1308 = vpop.permute.xlu0 %1307
    %v1310 = vadd.f32 %v1300, %v1308
    %v1311 = vtanh.pop %v1310
    %1313 = vrot.lane.b32.xlu0 %v1311, 64
    %v1314 = vpop.permute.xlu0 %1313
    %v1316 = vmul.f32 %v1299, %v1314
    %1317 = vmatprep.subr.bf16.mxu0 0
    %1318 = vmatpush1.bf16.msra.mxu0 %v100
    %1319 = vmatprep.subr.bf16.mxu0 0
    %1320 = vmatpush1.bf16.msra.mxu0 %v101
    %1321 = vmatprep.subr.bf16.mxu0 0
    %1322 = vmatpush1.bf16.msra.mxu0 0
    %1323 = vmatprep.subr.bf16.mxu0 0
    %1324 = vmatpush1.bf16.msra.mxu0 0
    %1325 = vmatprep.subr.bf16.mxu0 0
    %1326 = vmatpush1.bf16.msra.mxu0 0
    %1327 = vmatprep.subr.bf16.mxu0 0
    %1328 = vmatpush1.bf16.msra.mxu0 0
    %1329 = vmatprep.subr.bf16.mxu0 0
    %1330 = vmatpush1.bf16.msra.mxu0 0
    %1331 = vmatprep.subr.bf16.mxu0 0
    %1332 = vmatpush1.bf16.msra.mxu0 0
    %1333 = vmatprep.subr.bf16.mxu0 0
    %1334 = vmatpush1.bf16.msra.mxu0 0
    %1335 = vmatprep.subr.bf16.mxu0 0
    %1336 = vmatpush1.bf16.msra.mxu0 0
    %1337 = vmatprep.subr.bf16.mxu0 0
    %1338 = vmatpush1.bf16.msra.mxu0 0
    %1339 = vmatprep.subr.bf16.mxu0 0
    %1340 = vmatpush1.bf16.msra.mxu0 0
    %1341 = vmatprep.subr.bf16.mxu0 0
    %1342 = vmatpush1.bf16.msra.mxu0 0
    %1343 = vmatprep.subr.bf16.mxu0 0
    %1344 = vmatpush1.bf16.msra.mxu0 0
    %1345 = vmatprep.subr.bf16.mxu0 0
    %1346 = vmatpush1.bf16.msra.mxu0 0
    %1347 = vmatprep.subr.bf16.mxu0 0
    %1348 = vmatpush1.bf16.msra.mxu0 0
    %1349 = vmatprep.mubr.bf16.mxu0 0
    %1350 = vmatmul.mubr.bf16.gmra.mrb[0].mxu0 %v1253
    %v1351 = vpop.f32.mrb[0].mxu0
    %v1352 = vadd.f32 0.0, %v1351
    %v1353 = vpop.f32.mrb[0].mxu0
    %v1354 = vpop.f32.mrb[0].mxu0
    %v1355 = vpop.f32.mrb[0].mxu0
    %1356 = vdwg.mxu0
    %v1358 = vrot.slane %v1352, 4
    %v1360 = vadd.f32 %v211, %v1358
    %v1361 = vmul.f32 %v219, %v1360
    %v1362 = vtanh.pop %v1361
    %v1363 = vmul.f32 %v219, %v1362
    %v1364 = vadd.f32 %v1363, %v220
    %v1366 = vrot.slane %v1193, 6
    %v1368 = vmul.f32 %v1364, %v1366
    %1370 = vrot.lane.b32.xlu0 %v1364, 64
    %v1371 = vpop.permute.xlu0 %1370
    %v1373 = vmul.f32 %v1364, %v1371
    %1375 = vrot.lane.b32.xlu0 %v1373, 32
    %v1376 = vpop.permute.xlu0 %1375
    %v1378 = vadd.f32 %v1368, %v1376
    %v1379 = vtanh.pop %v1378
    %1381 = vrot.lane.b32.xlu0 %v1379, 64
    %v1382 = vpop.permute.xlu0 %1381
    %v1384 = vmul.f32 %v1364, %v1382
    %v1385 = vpack.c.bf16 %v1384, %v1384
    %v1386 = vpack.c.bf16 %v1316, %v1316
    %1388 = vrot.lane.b32.xlu0 %v1386, 32
    %v1389 = vpop.permute.xlu0 %1388
    %v1391 = vsel %vm221, %v1389, 0
    %1393 = vmatprep.subr.bf16.mxu0 0
    %1394 = vmatpush1.bf16.msra.mxu0 %v112
    %1395 = vmatprep.subr.bf16.mxu0 0
    %1396 = vmatpush1.bf16.msra.mxu0 %v113
    %1397 = vmatprep.subr.bf16.mxu0 0
    %1398 = vmatpush1.bf16.msra.mxu0 0
    %1399 = vmatprep.subr.bf16.mxu0 0
    %1400 = vmatpush1.bf16.msra.mxu0 0
    %1401 = vmatprep.subr.bf16.mxu0 0
    %1402 = vmatpush1.bf16.msra.mxu0 0
    %1403 = vmatprep.subr.bf16.mxu0 0
    %1404 = vmatpush1.bf16.msra.mxu0 0
    %1405 = vmatprep.subr.bf16.mxu0 0
    %1406 = vmatpush1.bf16.msra.mxu0 0
    %1407 = vmatprep.subr.bf16.mxu0 0
    %1408 = vmatpush1.bf16.msra.mxu0 0
    %1409 = vmatprep.subr.bf16.mxu0 0
    %1410 = vmatpush1.bf16.msra.mxu0 0
    %1411 = vmatprep.subr.bf16.mxu0 0
    %1412 = vmatpush1.bf16.msra.mxu0 0
    %1413 = vmatprep.subr.bf16.mxu0 0
    %1414 = vmatpush1.bf16.msra.mxu0 0
    %1415 = vmatprep.subr.bf16.mxu0 0
    %1416 = vmatpush1.bf16.msra.mxu0 0
    %1417 = vmatprep.subr.bf16.mxu0 0
    %1418 = vmatpush1.bf16.msra.mxu0 0
    %1419 = vmatprep.subr.bf16.mxu0 0
    %1420 = vmatpush1.bf16.msra.mxu0 0
    %1421 = vmatprep.subr.bf16.mxu0 0
    %1422 = vmatpush1.bf16.msra.mxu0 0
    %1423 = vmatprep.subr.bf16.mxu0 0
    %1424 = vmatpush1.bf16.msra.mxu0 0
    %1425 = vmatprep.mubr.bf16.mxu0 0
    %1426 = vmatmul.mubr.bf16.gmra.mrb[0].mxu0 %v1391
    %v1427 = vpop.f32.mrb[0].mxu0
    %v1428 = vadd.f32 0.0, %v1427
    %v1429 = vpop.f32.mrb[0].mxu0
    %v1430 = vpop.f32.mrb[0].mxu0
    %v1431 = vpop.f32.mrb[0].mxu0
    %1432 = vdwg.mxu0
    %v1434 = vrot.slane %v1385, 2
    %1435 = vrot.lane.b32.xlu0 %v1434, 32
    %v1436 = vpop.permute.xlu0 %1435
    %v1438 = vsel %vm221, %v1436, 0
    %1440 = vmatprep.subr.bf16.mxu0 0
    %1441 = vmatpush1.bf16.msra.mxu0 %v106
    %1442 = vmatprep.subr.bf16.mxu0 0
    %1443 = vmatpush1.bf16.msra.mxu0 %v107
    %1444 = vmatprep.subr.bf16.mxu0 0
    %1445 = vmatpush1.bf16.msra.mxu0 0
    %1446 = vmatprep.subr.bf16.mxu0 0
    %1447 = vmatpush1.bf16.msra.mxu0 0
    %1448 = vmatprep.subr.bf16.mxu0 0
    %1449 = vmatpush1.bf16.msra.mxu0 0
    %1450 = vmatprep.subr.bf16.mxu0 0
    %1451 = vmatpush1.bf16.msra.mxu0 0
    %1452 = vmatprep.subr.bf16.mxu0 0
    %1453 = vmatpush1.bf16.msra.mxu0 0
    %1454 = vmatprep.subr.bf16.mxu0 0
    %1455 = vmatpush1.bf16.msra.mxu0 0
    %1456 = vmatprep.subr.bf16.mxu0 0
    %1457 = vmatpush1.bf16.msra.mxu0 0
    %1458 = vmatprep.subr.bf16.mxu0 0
    %1459 = vmatpush1.bf16.msra.mxu0 0
    %1460 = vmatprep.subr.bf16.mxu0 0
    %1461 = vmatpush1.bf16.msra.mxu0 0
    %1462 = vmatprep.subr.bf16.mxu0 0
    %1463 = vmatpush1.bf16.msra.mxu0 0
    %1464 = vmatprep.subr.bf16.mxu0 0
    %1465 = vmatpush1.bf16.msra.mxu0 0
    %1466 = vmatprep.subr.bf16.mxu0 0
    %1467 = vmatpush1.bf16.msra.mxu0 0
    %1468 = vmatprep.subr.bf16.mxu0 0
    %1469 = vmatpush1.bf16.msra.mxu0 0
    %1470 = vmatprep.subr.bf16.mxu0 0
    %1471 = vmatpush1.bf16.msra.mxu0 0
    %1472 = vmatprep.mubr.bf16.mxu0 0
    %1473 = vmatmul.mubr.bf16.gmra.mrb[0].mxu0 %v1438
    %v1474 = vpop.f32.mrb[0].mxu0
    %v1475 = vadd.f32 %v1428, %v1474
    %v1476 = vpop.f32.mrb[0].mxu0
    %v1477 = vpop.f32.mrb[0].mxu0
    %v1478 = vpop.f32.mrb[0].mxu0
    %1479 = vdwg.mxu0
    %v1480 = vadd.f32 %v1475, %v119
    %v1481 = vmul.f32 %v219, %v1480
    %v1482 = vtanh.pop %v1481
    %v1483 = vmul.f32 %v219, %v1482
    %v1484 = vadd.f32 %v1483, %v220
    %v1485 = vmul.f32 %v1484, %v1310
    %1487 = vrot.lane.b32.xlu0 %v1484, 64
    %v1488 = vpop.permute.xlu0 %1487
    %v1490 = vmul.f32 %v1484, %v1488
    %1492 = vrot.lane.b32.xlu0 %v1490, 32
    %v1493 = vpop.permute.xlu0 %1492
    %v1495 = vadd.f32 %v1485, %v1493
    %v1496 = vtanh.pop %v1495
    %1498 = vrot.lane.b32.xlu0 %v1496, 64
    %v1499 = vpop.permute.xlu0 %1498
    %v1501 = vmul.f32 %v1484, %v1499
    %1502 = vmatprep.subr.bf16.mxu0 0
    %1503 = vmatpush1.bf16.msra.mxu0 %v100
    %1504 = vmatprep.subr.bf16.mxu0 0
    %1505 = vmatpush1.bf16.msra.mxu0 %v101
    %1506 = vmatprep.subr.bf16.mxu0 0
    %1507 = vmatpush1.bf16.msra.mxu0 0
    %1508 = vmatprep.subr.bf16.mxu0 0
    %1509 = vmatpush1.bf16.msra.mxu0 0
    %1510 = vmatprep.subr.bf16.mxu0 0
    %1511 = vmatpush1.bf16.msra.mxu0 0
    %1512 = vmatprep.subr.bf16.mxu0 0
    %1513 = vmatpush1.bf16.msra.mxu0 0
    %1514 = vmatprep.subr.bf16.mxu0 0
    %1515 = vmatpush1.bf16.msra.mxu0 0
    %1516 = vmatprep.subr.bf16.mxu0 0
    %1517 = vmatpush1.bf16.msra.mxu0 0
    %1518 = vmatprep.subr.bf16.mxu0 0
    %1519 = vmatpush1.bf16.msra.mxu0 0
    %1520 = vmatprep.subr.bf16.mxu0 0
    %1521 = vmatpush1.bf16.msra.mxu0 0
    %1522 = vmatprep.subr.bf16.mxu0 0
    %1523 = vmatpush1.bf16.msra.mxu0 0
    %1524 = vmatprep.subr.bf16.mxu0 0
    %1525 = vmatpush1.bf16.msra.mxu0 0
    %1526 = vmatprep.subr.bf16.mxu0 0
    %1527 = vmatpush1.bf16.msra.mxu0 0
    %1528 = vmatprep.subr.bf16.mxu0 0
    %1529 = vmatpush1.bf16.msra.mxu0 0
    %1530 = vmatprep.subr.bf16.mxu0 0
    %1531 = vmatpush1.bf16.msra.mxu0 0
    %1532 = vmatprep.subr.bf16.mxu0 0
    %1533 = vmatpush1.bf16.msra.mxu0 0
    %1534 = vmatprep.mubr.bf16.mxu0 0
    %1535 = vmatmul.mubr.bf16.gmra.mrb[0].mxu0 %v1438
    %v1536 = vpop.f32.mrb[0].mxu0
    %v1537 = vadd.f32 0.0, %v1536
    %v1538 = vpop.f32.mrb[0].mxu0
    %v1539 = vpop.f32.mrb[0].mxu0
    %v1540 = vpop.f32.mrb[0].mxu0
    %1541 = vdwg.mxu0
    %v1543 = vrot.slane %v1537, 2
    %v1545 = vadd.f32 %v211, %v1543
    %v1546 = vmul.f32 %v219, %v1545
    %v1547 = vtanh.pop %v1546
    %v1548 = vmul.f32 %v219, %v1547
    %v1549 = vadd.f32 %v1548, %v220
    %v1551 = vrot.slane %v1378, 6
    %v1553 = vmul.f32 %v1549, %v1551
    %1555 = vrot.lane.b32.xlu0 %v1549, 64
    %v1556 = vpop.permute.xlu0 %1555
    %v1558 = vmul.f32 %v1549, %v1556
    %1560 = vrot.lane.b32.xlu0 %v1558, 32
    %v1561 = vpop.permute.xlu0 %1560
    %v1563 = vadd.f32 %v1553, %v1561
    %v1564 = vtanh.pop %v1563
    %1566 = vrot.lane.b32.xlu0 %v1564, 64
    %v1567 = vpop.permute.xlu0 %1566
    %v1569 = vmul.f32 %v1549, %v1567
    %v1570 = vpack.c.bf16 %v1569, %v1569
    %v1571 = vpack.c.bf16 %v1501, %v1501
    %1573 = vrot.lane.b32.xlu0 %v1571, 32
    %v1574 = vpop.permute.xlu0 %1573
    %v1576 = vsel %vm221, %v1574, 0
    %1578 = vmatprep.subr.bf16.mxu0 0
    %1579 = vmatpush1.bf16.msra.mxu0 %v112
    %1580 = vmatprep.subr.bf16.mxu0 0
    %1581 = vmatpush1.bf16.msra.mxu0 %v113
    %1582 = vmatprep.subr.bf16.mxu0 0
    %1583 = vmatpush1.bf16.msra.mxu0 0
    %1584 = vmatprep.subr.bf16.mxu0 0
    %1585 = vmatpush1.bf16.msra.mxu0 0
    %1586 = vmatprep.subr.bf16.mxu0 0
    %1587 = vmatpush1.bf16.msra.mxu0 0
    %1588 = vmatprep.subr.bf16.mxu0 0
    %1589 = vmatpush1.bf16.msra.mxu0 0
    %1590 = vmatprep.subr.bf16.mxu0 0
    %1591 = vmatpush1.bf16.msra.mxu0 0
    %1592 = vmatprep.subr.bf16.mxu0 0
    %1593 = vmatpush1.bf16.msra.mxu0 0
    %1594 = vmatprep.subr.bf16.mxu0 0
    %1595 = vmatpush1.bf16.msra.mxu0 0
    %1596 = vmatprep.subr.bf16.mxu0 0
    %1597 = vmatpush1.bf16.msra.mxu0 0
    %1598 = vmatprep.subr.bf16.mxu0 0
    %1599 = vmatpush1.bf16.msra.mxu0 0
    %1600 = vmatprep.subr.bf16.mxu0 0
    %1601 = vmatpush1.bf16.msra.mxu0 0
    %1602 = vmatprep.subr.bf16.mxu0 0
    %1603 = vmatpush1.bf16.msra.mxu0 0
    %1604 = vmatprep.subr.bf16.mxu0 0
    %1605 = vmatpush1.bf16.msra.mxu0 0
    %1606 = vmatprep.subr.bf16.mxu0 0
    %1607 = vmatpush1.bf16.msra.mxu0 0
    %1608 = vmatprep.subr.bf16.mxu0 0
    %1609 = vmatpush1.bf16.msra.mxu0 0
    %1610 = vmatprep.mubr.bf16.mxu0 0
    %1611 = vmatmul.mubr.bf16.gmra.mrb[0].mxu0 %v1576
    %v1612 = vpop.f32.mrb[0].mxu0
    %v1613 = vadd.f32 0.0, %v1612
    %v1614 = vpop.f32.mrb[0].mxu0
    %v1615 = vpop.f32.mrb[0].mxu0
    %v1616 = vpop.f32.mrb[0].mxu0
    %1617 = vdwg.mxu0
    %v1619 = vrot.slane %v1570, 3
    %1620 = vrot.lane.b32.xlu0 %v1619, 32
    %v1621 = vpop.permute.xlu0 %1620
    %v1623 = vsel %vm221, %v1621, 0
    %1625 = vmatprep.subr.bf16.mxu0 0
    %1626 = vmatpush1.bf16.msra.mxu0 %v106
    %1627 = vmatprep.subr.bf16.mxu0 0
    %1628 = vmatpush1.bf16.msra.mxu0 %v107
    %1629 = vmatprep.subr.bf16.mxu0 0
    %1630 = vmatpush1.bf16.msra.mxu0 0
    %1631 = vmatprep.subr.bf16.mxu0 0
    %1632 = vmatpush1.bf16.msra.mxu0 0
    %1633 = vmatprep.subr.bf16.mxu0 0
    %1634 = vmatpush1.bf16.msra.mxu0 0
    %1635 = vmatprep.subr.bf16.mxu0 0
    %1636 = vmatpush1.bf16.msra.mxu0 0
    %1637 = vmatprep.subr.bf16.mxu0 0
    %1638 = vmatpush1.bf16.msra.mxu0 0
    %1639 = vmatprep.subr.bf16.mxu0 0
    %1640 = vmatpush1.bf16.msra.mxu0 0
    %1641 = vmatprep.subr.bf16.mxu0 0
    %1642 = vmatpush1.bf16.msra.mxu0 0
    %1643 = vmatprep.subr.bf16.mxu0 0
    %1644 = vmatpush1.bf16.msra.mxu0 0
    %1645 = vmatprep.subr.bf16.mxu0 0
    %1646 = vmatpush1.bf16.msra.mxu0 0
    %1647 = vmatprep.subr.bf16.mxu0 0
    %1648 = vmatpush1.bf16.msra.mxu0 0
    %1649 = vmatprep.subr.bf16.mxu0 0
    %1650 = vmatpush1.bf16.msra.mxu0 0
    %1651 = vmatprep.subr.bf16.mxu0 0
    %1652 = vmatpush1.bf16.msra.mxu0 0
    %1653 = vmatprep.subr.bf16.mxu0 0
    %1654 = vmatpush1.bf16.msra.mxu0 0
    %1655 = vmatprep.subr.bf16.mxu0 0
    %1656 = vmatpush1.bf16.msra.mxu0 0
    %1657 = vmatprep.mubr.bf16.mxu0 0
    %1658 = vmatmul.mubr.bf16.gmra.mrb[0].mxu0 %v1623
    %v1659 = vpop.f32.mrb[0].mxu0
    %v1660 = vadd.f32 %v1613, %v1659
    %v1661 = vpop.f32.mrb[0].mxu0
    %v1662 = vpop.f32.mrb[0].mxu0
    %v1663 = vpop.f32.mrb[0].mxu0
    %1664 = vdwg.mxu0
    %v1665 = vadd.f32 %v1660, %v119
    %v1666 = vmul.f32 %v219, %v1665
    %v1667 = vtanh.pop %v1666
    %v1668 = vmul.f32 %v219, %v1667
    %v1669 = vadd.f32 %v1668, %v220
    %v1670 = vmul.f32 %v1669, %v1495
    %1672 = vrot.lane.b32.xlu0 %v1669, 64
    %v1673 = vpop.permute.xlu0 %1672
    %v1675 = vmul.f32 %v1669, %v1673
    %1677 = vrot.lane.b32.xlu0 %v1675, 32
    %v1678 = vpop.permute.xlu0 %1677
    %v1680 = vadd.f32 %v1670, %v1678
    %v1681 = vtanh.pop %v1680
    %1683 = vrot.lane.b32.xlu0 %v1681, 64
    %v1684 = vpop.permute.xlu0 %1683
    %v1686 = vmul.f32 %v1669, %v1684
    %v1687 = vld [vmem:[%s7] sm:$0xff]
    %v1688 = vld [vmem:[%s7 + $0x8] sm:$0xff]
    %v1689 = vld [vmem:[%s7 + $0x10] sm:$0xff]
    %v1690 = vld [vmem:[%s7 + $0x18] sm:$0xff]
    %v1691 = vld [vmem:[#allocation8] sm:$0x1]
    %v1693 = vlaneseq
    %v1694 = vshrl.u32 %v1693, 7
    %v1695 = vsub.s32 0, %v1694
    %v1696 = vrot.slane %v1691, %v1695
    %1699 = vrot.lane.b32.xlu0 %v1686, 32
    %v1700 = vpop.permute.xlu0 %1699
    %v1701 = vsel %vm221, %v1700, 0
    %1703 = vmatprep.subr.mxu0 0.0
    %1704 = vmatpush1.msra.mxu0 %v1687
    %1705 = vmatprep.subr.mxu0 0.0
    %1706 = vmatpush1.msra.mxu0 %v1688
    %1707 = vmatprep.subr.mxu0 0.0
    %1708 = vmatpush1.msra.mxu0 %v1689
    %1709 = vmatprep.subr.mxu0 0.0
    %1710 = vmatpush1.msra.mxu0 %v1690
    %1711 = vmatprep.subr.mxu0 0.0
    %1712 = vmatpush1.msra.mxu0 0.0
    %1713 = vmatprep.subr.mxu0 0.0
    %1714 = vmatpush1.msra.mxu0 0.0
    %1715 = vmatprep.subr.mxu0 0.0
    %1716 = vmatpush1.msra.mxu0 0.0
    %1717 = vmatprep.subr.mxu0 0.0
    %1718 = vmatpush1.msra.mxu0 0.0
    %1719 = vmatprep.subr.mxu0 0.0
    %1720 = vmatpush1.msra.mxu0 0.0
    %1721 = vmatprep.subr.mxu0 0.0
    %1722 = vmatpush1.msra.mxu0 0.0
    %1723 = vmatprep.subr.mxu0 0.0
    %1724 = vmatpush1.msra.mxu0 0.0
    %1725 = vmatprep.subr.mxu0 0.0
    %1726 = vmatpush1.msra.mxu0 0.0
    %1727 = vmatprep.subr.mxu0 0.0
    %1728 = vmatpush1.msra.mxu0 0.0
    %1729 = vmatprep.subr.mxu0 0.0
    %1730 = vmatpush1.msra.mxu0 0.0
    %1731 = vmatprep.subr.mxu0 0.0
    %1732 = vmatpush1.msra.mxu0 0.0
    %1733 = vmatprep.subr.mxu0 0.0
    %1734 = vmatpush1.msra.mxu0 0.0
    %1735 = vmatprep.subr.mxu0 0.0
    %1736 = vmatpush1.msra.mxu0 0.0
    %1737 = vmatprep.subr.mxu0 0.0
    %1738 = vmatpush1.msra.mxu0 0.0
    %1739 = vmatprep.subr.mxu0 0.0
    %1740 = vmatpush1.msra.mxu0 0.0
    %1741 = vmatprep.subr.mxu0 0.0
    %1742 = vmatpush1.msra.mxu0 0.0
    %1743 = vmatprep.subr.mxu0 0.0
    %1744 = vmatpush1.msra.mxu0 0.0
    %1745 = vmatprep.subr.mxu0 0.0
    %1746 = vmatpush1.msra.mxu0 0.0
    %1747 = vmatprep.subr.mxu0 0.0
    %1748 = vmatpush1.msra.mxu0 0.0
    %1749 = vmatprep.subr.mxu0 0.0
    %1750 = vmatpush1.msra.mxu0 0.0
    %1751 = vmatprep.subr.mxu0 0.0
    %1752 = vmatpush1.msra.mxu0 0.0
    %1753 = vmatprep.subr.mxu0 0.0
    %1754 = vmatpush1.msra.mxu0 0.0
    %1755 = vmatprep.subr.mxu0 0.0
    %1756 = vmatpush1.msra.mxu0 0.0
    %1757 = vmatprep.subr.mxu0 0.0
    %1758 = vmatpush1.msra.mxu0 0.0
    %1759 = vmatprep.subr.mxu0 0.0
    %1760 = vmatpush1.msra.mxu0 0.0
    %1761 = vmatprep.subr.mxu0 0.0
    %1762 = vmatpush1.msra.mxu0 0.0
    %1763 = vmatprep.subr.mxu0 0.0
    %1764 = vmatpush1.msra.mxu0 0.0
    %1765 = vmatprep.subr.mxu0 0.0
    %1766 = vmatpush1.msra.mxu0 0.0
    %1767 = vmatprep.mubr.f32.mxu0 0.0
    %1768 = vmatmul.mubr.f32.gmra.mrb[0].mxu0 %v1701
    %v1769 = vpop.f32.mrb[0].mxu0
    %v1770 = vadd.f32 %v1696, %v1769
    %v1771 = vpop.f32.mrb[0].mxu0
    %1772 = vdwg.mxu0
    %v1773 = vmax.f32 %v1770, 0.0
    %v1774 = vld [vmem:[%s9] sm:$0xff]
    %v1775 = vld [vmem:[%s9 + $0x8] sm:$0xff]
    %v1776 = vld [vmem:[%s10] sm:$0x1]
    %v1778 = vlaneseq
    %v1779 = vshrl.u32 %v1778, 7
    %v1780 = vsub.s32 0, %v1779
    %v1781 = vrot.slane %v1776, %v1780
    %v1784 = vsel %vm132, %v1773, 0
    %1786 = vmatprep.subr.mxu0 0.0
    %1787 = vmatpush1.msra.mxu0 %v1774
    %1788 = vmatprep.subr.mxu0 0.0
    %1789 = vmatpush1.msra.mxu0 %v1775
    %1790 = vmatprep.subr.mxu0 0.0
    %1791 = vmatpush1.msra.mxu0 0.0
    %1792 = vmatprep.subr.mxu0 0.0
    %1793 = vmatpush1.msra.mxu0 0.0
    %1794 = vmatprep.subr.mxu0 0.0
    %1795 = vmatpush1.msra.mxu0 0.0
    %1796 = vmatprep.subr.mxu0 0.0
    %1797 = vmatpush1.msra.mxu0 0.0
    %1798 = vmatprep.subr.mxu0 0.0
    %1799 = vmatpush1.msra.mxu0 0.0
    %1800 = vmatprep.subr.mxu0 0.0
    %1801 = vmatpush1.msra.mxu0 0.0
    %1802 = vmatprep.subr.mxu0 0.0
    %1803 = vmatpush1.msra.mxu0 0.0
    %1804 = vmatprep.subr.mxu0 0.0
    %1805 = vmatpush1.msra.mxu0 0.0
    %1806 = vmatprep.subr.mxu0 0.0
    %1807 = vmatpush1.msra.mxu0 0.0
    %1808 = vmatprep.subr.mxu0 0.0
    %1809 = vmatpush1.msra.mxu0 0.0
    %1810 = vmatprep.subr.mxu0 0.0
    %1811 = vmatpush1.msra.mxu0 0.0
    %1812 = vmatprep.subr.mxu0 0.0
    %1813 = vmatpush1.msra.mxu0 0.0
    %1814 = vmatprep.subr.mxu0 0.0
    %1815 = vmatpush1.msra.mxu0 0.0
    %1816 = vmatprep.subr.mxu0 0.0
    %1817 = vmatpush1.msra.mxu0 0.0
    %1818 = vmatprep.subr.mxu0 0.0
    %1819 = vmatpush1.msra.mxu0 0.0
    %1820 = vmatprep.subr.mxu0 0.0
    %1821 = vmatpush1.msra.mxu0 0.0
    %1822 = vmatprep.subr.mxu0 0.0
    %1823 = vmatpush1.msra.mxu0 0.0
    %1824 = vmatprep.subr.mxu0 0.0
    %1825 = vmatpush1.msra.mxu0 0.0
    %1826 = vmatprep.subr.mxu0 0.0
    %1827 = vmatpush1.msra.mxu0 0.0
    %1828 = vmatprep.subr.mxu0 0.0
    %1829 = vmatpush1.msra.mxu0 0.0
    %1830 = vmatprep.subr.mxu0 0.0
    %1831 = vmatpush1.msra.mxu0 0.0
    %1832 = vmatprep.subr.mxu0 0.0
    %1833 = vmatpush1.msra.mxu0 0.0
    %1834 = vmatprep.subr.mxu0 0.0
    %1835 = vmatpush1.msra.mxu0 0.0
    %1836 = vmatprep.subr.mxu0 0.0
    %1837 = vmatpush1.msra.mxu0 0.0
    %1838 = vmatprep.subr.mxu0 0.0
    %1839 = vmatpush1.msra.mxu0 0.0
    %1840 = vmatprep.subr.mxu0 0.0
    %1841 = vmatpush1.msra.mxu0 0.0
    %1842 = vmatprep.subr.mxu0 0.0
    %1843 = vmatpush1.msra.mxu0 0.0
    %1844 = vmatprep.subr.mxu0 0.0
    %1845 = vmatpush1.msra.mxu0 0.0
    %1846 = vmatprep.subr.mxu0 0.0
    %1847 = vmatpush1.msra.mxu0 0.0
    %1848 = vmatprep.subr.mxu0 0.0
    %1849 = vmatpush1.msra.mxu0 0.0
    %1850 = vmatprep.mubr.f32.mxu0 0.0
    %1851 = vmatmul.mubr.f32.gmra.mrb[0].mxu0 %v1784
    %v1852 = vpop.f32.mrb[0].mxu0
    %v1853 = vadd.f32 %v1781, %v1852
    %v1854 = vpop.f32.mrb[0].mxu0
    %1855 = vdwg.mxu0
    %v1856 = vxor.u32 %v1853, 2147483648
    %v1857 = vmul.f32 %v1856, 1.442695
    %v1858 = vpow.pop %v1857
    %v1859 = vadd.f32 %v1858, 1.0
    %v1860 = vrcp.pop %v1859
    %v1861 = vmul.f32 1.0, %v1860
    %vm1862 = vcmask 123904
    %1863 = vst.msk [vmem:[#allocation10] sm:$0x3] %vm1862, %v1861
    %1865 = vrot.lane.b32.xlu0 %v1569, 32
    %v1866 = vpop.permute.xlu0 %1865
    %v1868 = vrot.slane %v1686, 2
    %1869 = vrot.lane.b32.xlu0 %v1868, 64
    %v1870 = vpop.permute.xlu0 %1869
    %1873 = vrot.lane.b32.xlu0 %v1563, 32
    %v1874 = vpop.permute.xlu0 %1873
    %v1877 = vrot.slane %v1680, 2
    %1878 = vrot.lane.b32.xlu0 %v1877, 64
    %v1879 = vpop.permute.xlu0 %1878
    %v1881 = vsel %vm221, %v1866, %v1870
    %vm1882 = vcmask 523264
    %v1883 = vsel %vm1882, %v1881, %v1874
    %vm1884 = vcmask 785408
    %v1885 = vsel %vm1884, %v1883, %v1879
    %1886 = vst [vmem:[#allocation11 - $0x6] sm:$0xc0] %v1885
    // Predicated region
    $region62: #{tpu_custom_call.1} parent=1 // pred_check
      _
    $region63: #{tpu_custom_call.1} parent=1 // pred_check_branch
      %1888 = sbr.rel (0) target = $region65
    $region64: #{tpu_custom_call.1} parent=1 // pred_region
      %s1890 = ssub.s32 32, 32
      %1891 = vsyncadd [#allocation4], %s1890
      %s1893 = sshll.u32 [#allocation10], 4
      %s1894 = int_to_ptr.vmem [resolvable:$true] %s1893
      %1896 = dma.vmem_to_hbm [thread:$0]  %s1894, 32, %s11, [#allocation4]
    $region65: #{tpu_custom_call.1} parent=1 // pred_fallthru
      _
    // Predicated region
    $region66: #{tpu_custom_call.1} parent=1 // pred_check
      _
    $region67: #{tpu_custom_call.1} parent=1 // pred_check_branch
      %1898 = sbr.rel (0) target = $region69
    $region68: #{tpu_custom_call.1} parent=1 // pred_region
      %s1900 = ssub.s32 32, 32
      %1901 = vsyncadd [#allocation12], %s1900
      %s1903 = sshll.u32 [#allocation11], 4
      %s1904 = int_to_ptr.vmem [resolvable:$true] %s1903
      %1906 = dma.vmem_to_hbm [thread:$0]  %s1904, 32, %s12, [#allocation12]
    $region69: #{tpu_custom_call.1} parent=1 // pred_fallthru
      _
    // Predicated region
    $region70: #{tpu_custom_call.1} parent=1 // pred_check
      _
    $region71: #{tpu_custom_call.1} parent=1 // pred_check_branch
      %1908 = sbr.rel (0) target = $region73
    $region72: #{tpu_custom_call.1} parent=1 // pred_region
      %1909 = dma.done [#allocation4], 32
    $region73: #{tpu_custom_call.1} parent=1 // pred_fallthru
      _
    // Predicated region
    $region74: #{tpu_custom_call.1} parent=1 // pred_check
      _
    $region75: #{tpu_custom_call.1} parent=1 // pred_check_branch
      %1911 = sbr.rel (0) target = $region77
    $region76: #{tpu_custom_call.1} parent=1 // pred_region
      %1912 = dma.done [#allocation12], 32
    $region77: #{tpu_custom_call.1} parent=1 // pred_fallthru
      _
    %1913 = vsyncpa [#allocation3], 1
    %1914 = vsyncpa [#allocation6], 1
    %1915 = vsyncpa [#allocation9], 1
    %1916 = vsyncpa [#allocation4], 1
    %1917 = vsyncpa [#allocation12], 1

</llo_original>
